<compile_context>
chip_gen: v7x
topology: tpu7x:2x2x1
jax: 0.10.0
libtpu: 0.0.40
codegen_flags: <defaults>
</compile_context>

<pallas_src>
import jax
import jax.numpy as jnp
from jax import lax
from jax.experimental import pallas as pl
from jax.experimental.pallas import tpu as pltpu


def _gra_kernel(x_ref,
                wf_ref, bf_ref,                 # fused theta|phi|gx : (3ic, c) bf16, (3ic, 1) f32
                wggi_ref, wggo_ref, bgg_ref,    # gg_spatial : (isz, hw) bf16 x2, (isz, 1) f32
                w1g_ref, w1s_ref, b1_ref,       # W_spatial conv1 : (m,1) f32, (m,isz) bf16, (m,1) f32
                w2_ref, b2_ref,                 # W_spatial conv2 : (m,1) f32, (1,1) f32
                o_ref):
    x = x_ref[...]                               # (c, hw) f32
    ic = wf_ref.shape[0] // 3

    # Fused theta / phi / gx projections: conv1x1 + folded BN + ReLU.
    proj = jnp.dot(wf_ref[...], x.astype(jnp.bfloat16),
                   preferred_element_type=jnp.float32) + bf_ref[...]
    proj = jnp.maximum(proj, 0.0)                # (3ic, hw) f32
    theta = proj[0:ic]                           # (ic, hw)
    phi = proj[ic:2 * ic]                        # (ic, hw)
    g = proj[2 * ic:3 * ic]                      # (ic, hw)
    theta_b = theta.astype(jnp.bfloat16)
    phi_b = phi.astype(jnp.bfloat16)

    # gg_spatial, re-associated so the (hw, hw) relation matrix never exists:
    #   term_in [o, j] = sum_q Wgg_in [o, q] * (theta_j . phi_q)
    #   term_out[o, j] = sum_p Wgg_out[o, p] * (theta_p . phi_j)
    b_in = lax.dot_general(wggi_ref[...], phi_b, (((1,), (1,)), ((), ())),
                           preferred_element_type=jnp.float32)      # (isz, ic)
    b_out = lax.dot_general(wggo_ref[...], theta_b, (((1,), (1,)), ((), ())),
                            preferred_element_type=jnp.float32)     # (isz, ic)
    term_in = jnp.dot(b_in.astype(jnp.bfloat16), theta_b,
                      preferred_element_type=jnp.float32)           # (isz, hw)
    term_out = jnp.dot(b_out.astype(jnp.bfloat16), phi_b,
                       preferred_element_type=jnp.float32)          # (isz, hw)
    gs = jnp.maximum(term_in + term_out + bgg_ref[...], 0.0)        # (isz, hw) f32

    # gx_spatial channel mean (cross-sublane XLU reduction; intentionally not a matmul).
    gmean = jnp.mean(g, axis=0, keepdims=True)                      # (1, hw)

    # W_spatial conv1 (+BN+ReLU): weight split over the concat [g_xs, Gs_joint].
    h1 = (w1g_ref[...] * gmean
          + jnp.dot(w1s_ref[...], gs.astype(jnp.bfloat16),
                    preferred_element_type=jnp.float32)
          + b1_ref[...])
    h1 = jnp.maximum(h1, 0.0)                                       # (m, hw)

    # W_spatial conv2 (+BN, no ReLU) -> single channel; sigmoid gate over channels.
    wys = jnp.sum(h1 * w2_ref[...], axis=0, keepdims=True) + b2_ref[...]   # (1, hw)
    o_ref[...] = jax.nn.sigmoid(wys) * x                            # (c, hw)


def global_relation_attention(x_nchw, params):
    """x_nchw: (b, c, h, w) float32.  Returns (b, c, h, w)."""
    b, c, h, w = x_nchw.shape
    hw = h * w
    x_cp = x_nchw.reshape(b, c, hw)              # free reshape, no HBM transpose

    (wf, bf, wgg_in, wgg_out, bgg, w1g, w1s, b1, w2, b2) = params
    ic = wf.shape[0] // 3
    isz = wgg_in.shape[0]
    m = w1s.shape[0]

    # bf16 operands for the MXU; accumulation stays f32 inside the kernel.
    wf_b = wf.astype(jnp.bfloat16)
    wggi_b = wgg_in.astype(jnp.bfloat16)
    wggo_b = wgg_out.astype(jnp.bfloat16)
    w1s_b = w1s.astype(jnp.bfloat16)

    def full2d(a):
        return pl.BlockSpec(a.shape, lambda i: (0, 0))

    flops_per_b = (2 * (3 * ic) * c * hw        # fused projection
                   + 4 * isz * hw * ic          # Wgg_{in,out} @ {phi,theta}^T
                   + 4 * isz * ic * hw          # (.) @ {theta,phi}
                   + 2 * m * isz * hw)          # W_spatial conv1
    weight_bytes = sum(int(a.size) * a.dtype.itemsize
                       for a in (wf_b, bf, wggi_b, wggo_b, bgg, w1g, w1s_b, b1, w2, b2))
    cost = pl.CostEstimate(flops=b * flops_per_b,
                           transcendentals=b * hw,
                           bytes_accessed=b * 2 * c * hw * 4 + weight_bytes)

    out = pl.pallas_call(
        _gra_kernel,
        out_shape=jax.ShapeDtypeStruct((b, c, hw), jnp.float32),
        grid_spec=pltpu.PrefetchScalarGridSpec(
            num_scalar_prefetch=0,
            grid=(b,),
            in_specs=[
                pl.BlockSpec((None, c, hw), lambda i: (i, 0, 0)),   # x, batch squeezed
                full2d(wf_b), full2d(bf),                           # fused projections
                full2d(wggi_b), full2d(wggo_b), full2d(bgg),        # gg_spatial
                full2d(w1g), full2d(w1s_b), full2d(b1),             # W_spatial conv1
                full2d(w2), full2d(b2),                             # W_spatial conv2
            ],
            out_specs=pl.BlockSpec((None, c, hw), lambda i: (i, 0, 0)),
        ),
        compiler_params=pltpu.CompilerParams(
            dimension_semantics=("parallel",),
            vmem_limit_bytes=48 * 1024 * 1024),
        cost_estimate=cost,
    )(x_cp, wf_b, bf, wggi_b, wggo_b, bgg, w1g, w1s_b, b1, w2, b2)

    return out.reshape(b, c, h, w)               # free reshape back to NCHW


# ----------------------------------------------------------------------------
# deterministic parameter construction (conv1x1 weight + eval-mode BN folded)
# ----------------------------------------------------------------------------
def _fold_bn(key, in_ch, out_ch, eps=1e-5):
    """Returns (W_folded (out,in), bias (out,1)) for conv1x1(no bias) + BatchNorm2d."""
    k1, k2, k3, k4, k5 = jax.random.split(key, 5)
    w = jax.random.normal(k1, (out_ch, in_ch), jnp.float32) * 0.1
    gamma = 1.0 + 0.1 * jax.random.normal(k2, (out_ch,), jnp.float32)
    beta = 0.1 * jax.random.normal(k3, (out_ch,), jnp.float32)
    mean = 0.1 * jax.random.normal(k4, (out_ch,), jnp.float32)
    var = jnp.abs(jax.random.normal(k5, (out_ch,), jnp.float32)) + 0.5
    scale = gamma / jnp.sqrt(var + eps)
    return w * scale[:, None], (beta - mean * scale)[:, None]


def make_params(key, in_channel, in_spatial, cha_ratio, spa_ratio, down_ratio):
    ic = in_channel // cha_ratio
    isz = in_spatial // spa_ratio
    num_s = 1 + isz
    m = num_s // down_ratio
    ks = jax.random.split(key, 6)

    wt, bt = _fold_bn(ks[0], in_channel, ic)         # theta_spatial
    wp, bp = _fold_bn(ks[1], in_channel, ic)         # phi_spatial
    wg, bg = _fold_bn(ks[2], in_channel, ic)         # gx_spatial
    wf = jnp.concatenate([wt, wp, wg], axis=0)       # fused (3ic, c)
    bf = jnp.concatenate([bt, bp, bg], axis=0)       # fused (3ic, 1)
    wgg, bgg = _fold_bn(ks[3], 2 * in_spatial, isz)  # gg_spatial (isz, 2hw)
    wgg_in, wgg_out = wgg[:, :in_spatial], wgg[:, in_spatial:]
    w1, b1 = _fold_bn(ks[4], num_s, m)               # W_spatial conv1 (m, 1+isz)
    w1g, w1s = w1[:, :1], w1[:, 1:]
    w2, b2 = _fold_bn(ks[5], m, 1)                   # W_spatial conv2 (1, m)
    return (wf, bf, wgg_in, wgg_out, bgg, w1g, w1s, b1, w2.T, b2)


# ----------------------------------------------------------------------------
# pure-JAX f32 reference (module-faithful: explicit (hw,hw) relation matrix,
# unfused projections) used as a sanity check.
# ----------------------------------------------------------------------------
def reference(x_nchw, params):
    b, c, h, w = x_nchw.shape
    hw = h * w
    (wf, bf, wgg_in, wgg_out, bgg, w1g, w1s, b1, w2, b2) = params
    ic = wf.shape[0] // 3
    x = x_nchw.reshape(b, c, hw)
    wt, wp, wg = wf[:ic], wf[ic:2 * ic], wf[2 * ic:]
    bt, bp, bg = bf[:ic], bf[ic:2 * ic], bf[2 * ic:]
    theta = jax.nn.relu(jnp.einsum("oc,bcj->boj", wt, x) + bt)
    phi = jax.nn.relu(jnp.einsum("oc,bcj->boj", wp, x) + bp)
    g = jax.nn.relu(jnp.einsum("oc,bcj->boj", wg, x) + bg)
    glob = jnp.einsum("bkp,bkq->bpq", theta, phi)        # glob[p,q] = theta_p . phi_q
    gs = jax.nn.relu(jnp.einsum("oq,bjq->boj", wgg_in, glob)
                     + jnp.einsum("oq,bqj->boj", wgg_out, glob) + bgg)
    gmean = jnp.mean(g, axis=1, keepdims=True)
    h1 = jax.nn.relu(w1g * gmean + jnp.einsum("ok,bkj->boj", w1s, gs) + b1)
    wys = jnp.sum(h1 * w2, axis=1, keepdims=True) + b2
    out = jax.nn.sigmoid(wys) * x
    return out.reshape(b, c, h, w)


if __name__ == "__main__":
    # Small shapes consistent with the module: in_spatial must equal h*w.
    B, C, H, W = 2, 16, 16, 16
    in_spatial = H * W                                  # 256
    cha_ratio, spa_ratio, down_ratio = 2, 2, 8          # ic=8, isz=128, m=16

    key = jax.random.PRNGKey(0)
    kx, kp = jax.random.split(key)
    x = jax.random.normal(kx, (B, C, H, W), jnp.float32)
    params = make_params(kp, C, in_spatial, cha_ratio, spa_ratio, down_ratio)

    out = jax.block_until_ready(global_relation_attention(x, params))
    ref = reference(x, params)
    assert out.shape == (B, C, H, W)
    # Kernel uses bf16 matmul operands with f32 accumulation, so compare against
    # the pure-f32 reference at a bf16-level tolerance.
    assert jnp.allclose(out, ref, atol=5e-2, rtol=5e-2), "mismatch vs reference"
    print("KERNEL_OK")
</pallas_src>

<mosaic_0001>
module attributes {stable_mosaic.version = 11 : i64} {
  func.func @_gra_kernel(%arg0: i32, %arg1: memref<1x16x256xf32, #tpu.memory_space<vmem>>, %arg2: memref<24x16xbf16, #tpu.memory_space<vmem>>, %arg3: memref<24x1xf32, #tpu.memory_space<vmem>>, %arg4: memref<128x256xbf16, #tpu.memory_space<vmem>>, %arg5: memref<128x256xbf16, #tpu.memory_space<vmem>>, %arg6: memref<128x1xf32, #tpu.memory_space<vmem>>, %arg7: memref<16x1xf32, #tpu.memory_space<vmem>>, %arg8: memref<16x128xbf16, #tpu.memory_space<vmem>>, %arg9: memref<16x1xf32, #tpu.memory_space<vmem>>, %arg10: memref<16x1xf32, #tpu.memory_space<vmem>>, %arg11: memref<1x1xf32, #tpu.memory_space<vmem>>, %arg12: memref<1x16x256xf32, #tpu.memory_space<vmem>>) attributes {dimension_semantics = [#tpu.dimension_semantics<parallel>], iteration_bounds = array<i64: 2>, scalar_prefetch = 0 : i64, scratch_operands = 0 : i64, tpu.core_type = #tpu.core_type<tc>, window_params = [{transform_indices = @transform_0, window_bounds = array<i64: 1, 16, 256>}, {pipeline_mode = #tpu.pipeline_mode<synchronous>, transform_indices = @transform_1, window_bounds = array<i64: 24, 16>}, {pipeline_mode = #tpu.pipeline_mode<synchronous>, transform_indices = @transform_2, window_bounds = array<i64: 24, 1>}, {pipeline_mode = #tpu.pipeline_mode<synchronous>, transform_indices = @transform_3, window_bounds = array<i64: 128, 256>}, {pipeline_mode = #tpu.pipeline_mode<synchronous>, transform_indices = @transform_4, window_bounds = array<i64: 128, 256>}, {pipeline_mode = #tpu.pipeline_mode<synchronous>, transform_indices = @transform_5, window_bounds = array<i64: 128, 1>}, {pipeline_mode = #tpu.pipeline_mode<synchronous>, transform_indices = @transform_6, window_bounds = array<i64: 16, 1>}, {pipeline_mode = #tpu.pipeline_mode<synchronous>, transform_indices = @transform_7, window_bounds = array<i64: 16, 128>}, {pipeline_mode = #tpu.pipeline_mode<synchronous>, transform_indices = @transform_8, window_bounds = array<i64: 16, 1>}, {pipeline_mode = #tpu.pipeline_mode<synchronous>, transform_indices = @transform_9, window_bounds = array<i64: 16, 1>}, {pipeline_mode = #tpu.pipeline_mode<synchronous>, transform_indices = @transform_10, window_bounds = array<i64: 1, 1>}, {transform_indices = @transform_11, window_bounds = array<i64: 1, 16, 256>}]} {
    %c0 = arith.constant 0 : index
    %c0_0 = arith.constant 0 : index
    %c0_1 = arith.constant 0 : index
    %0 = vector.load %arg1[%c0, %c0_0, %c0_1] : memref<1x16x256xf32, #tpu.memory_space<vmem>>, vector<1x16x256xf32>
    %1 = vector.shape_cast %0 : vector<1x16x256xf32> to vector<16x256xf32>
    %c0_2 = arith.constant 0 : index
    %c0_3 = arith.constant 0 : index
    %2 = vector.load %arg2[%c0_2, %c0_3] : memref<24x16xbf16, #tpu.memory_space<vmem>>, vector<24x16xbf16>
    %3 = arith.truncf %1 : vector<16x256xf32> to vector<16x256xbf16>
    %cst = arith.constant dense<0.000000e+00> : vector<24x256xf32>
    %4 = tpu.matmul %2, %3, %cst {dimension_numbers = #tpu.dot_dimension_numbers<[1], [0], [0], [1], [0, 0, 1, 1], [], []>} : vector<24x16xbf16>, vector<16x256xbf16>, vector<24x256xf32> -> vector<24x256xf32>
    %c0_4 = arith.constant 0 : index
    %c0_5 = arith.constant 0 : index
    %5 = vector.load %arg3[%c0_4, %c0_5] : memref<24x1xf32, #tpu.memory_space<vmem>>, vector<24x1xf32>
    %6 = vector.broadcast %5 : vector<24x1xf32> to vector<24x256xf32>
    %7 = arith.addf %4, %6 : vector<24x256xf32>
    %cst_6 = arith.constant 0.000000e+00 : f32
    %8 = vector.broadcast %cst_6 : f32 to vector<24x256xf32>
    %9 = arith.maximumf %7, %8 : vector<24x256xf32>
    %10 = vector.extract_strided_slice %9 {offsets = [0, 0], sizes = [8, 256], strides = [1, 1]} : vector<24x256xf32> to vector<8x256xf32>
    %11 = vector.extract_strided_slice %9 {offsets = [8, 0], sizes = [8, 256], strides = [1, 1]} : vector<24x256xf32> to vector<8x256xf32>
    %12 = vector.extract_strided_slice %9 {offsets = [16, 0], sizes = [8, 256], strides = [1, 1]} : vector<24x256xf32> to vector<8x256xf32>
    %13 = arith.truncf %10 : vector<8x256xf32> to vector<8x256xbf16>
    %14 = arith.truncf %11 : vector<8x256xf32> to vector<8x256xbf16>
    %c0_7 = arith.constant 0 : index
    %c0_8 = arith.constant 0 : index
    %15 = vector.load %arg4[%c0_7, %c0_8] : memref<128x256xbf16, #tpu.memory_space<vmem>>, vector<128x256xbf16>
    %cst_9 = arith.constant dense<0.000000e+00> : vector<128x8xf32>
    %16 = tpu.matmul %15, %14, %cst_9 {dimension_numbers = #tpu.dot_dimension_numbers<[1], [1], [0], [0], [0, 0, 1, 0], [], []>} : vector<128x256xbf16>, vector<8x256xbf16>, vector<128x8xf32> -> vector<128x8xf32>
    %c0_10 = arith.constant 0 : index
    %c0_11 = arith.constant 0 : index
    %17 = vector.load %arg5[%c0_10, %c0_11] : memref<128x256xbf16, #tpu.memory_space<vmem>>, vector<128x256xbf16>
    %cst_12 = arith.constant dense<0.000000e+00> : vector<128x8xf32>
    %18 = tpu.matmul %17, %13, %cst_12 {dimension_numbers = #tpu.dot_dimension_numbers<[1], [1], [0], [0], [0, 0, 1, 0], [], []>} : vector<128x256xbf16>, vector<8x256xbf16>, vector<128x8xf32> -> vector<128x8xf32>
    %19 = arith.truncf %16 : vector<128x8xf32> to vector<128x8xbf16>
    %cst_13 = arith.constant dense<0.000000e+00> : vector<128x256xf32>
    %20 = tpu.matmul %19, %13, %cst_13 {dimension_numbers = #tpu.dot_dimension_numbers<[1], [0], [0], [1], [0, 0, 1, 1], [], []>} : vector<128x8xbf16>, vector<8x256xbf16>, vector<128x256xf32> -> vector<128x256xf32>
    %21 = arith.truncf %18 : vector<128x8xf32> to vector<128x8xbf16>
    %cst_14 = arith.constant dense<0.000000e+00> : vector<128x256xf32>
    %22 = tpu.matmul %21, %14, %cst_14 {dimension_numbers = #tpu.dot_dimension_numbers<[1], [0], [0], [1], [0, 0, 1, 1], [], []>} : vector<128x8xbf16>, vector<8x256xbf16>, vector<128x256xf32> -> vector<128x256xf32>
    %23 = arith.addf %20, %22 : vector<128x256xf32>
    %c0_15 = arith.constant 0 : index
    %c0_16 = arith.constant 0 : index
    %24 = vector.load %arg6[%c0_15, %c0_16] : memref<128x1xf32, #tpu.memory_space<vmem>>, vector<128x1xf32>
    %25 = vector.broadcast %24 : vector<128x1xf32> to vector<128x256xf32>
    %26 = arith.addf %23, %25 : vector<128x256xf32>
    %cst_17 = arith.constant 0.000000e+00 : f32
    %27 = vector.broadcast %cst_17 : f32 to vector<128x256xf32>
    %28 = arith.maximumf %26, %27 : vector<128x256xf32>
    %cst_18 = arith.constant dense<0.000000e+00> : vector<256xf32>
    %29 = vector.multi_reduction <add>, %12, %cst_18 [0] : vector<8x256xf32> to vector<256xf32>
    %30 = vector.shape_cast %29 : vector<256xf32> to vector<1x256xf32>
    %cst_19 = arith.constant 8.000000e+00 : f32
    %31 = vector.broadcast %cst_19 : f32 to vector<1x256xf32>
    %32 = arith.divf %30, %31 : vector<1x256xf32>
    %c0_20 = arith.constant 0 : index
    %c0_21 = arith.constant 0 : index
    %33 = vector.load %arg7[%c0_20, %c0_21] : memref<16x1xf32, #tpu.memory_space<vmem>>, vector<16x1xf32>
    %34 = vector.broadcast %33 : vector<16x1xf32> to vector<16x256xf32>
    %35 = vector.broadcast %32 : vector<1x256xf32> to vector<16x256xf32>
    %36 = arith.mulf %34, %35 : vector<16x256xf32>
    %c0_22 = arith.constant 0 : index
    %c0_23 = arith.constant 0 : index
    %37 = vector.load %arg8[%c0_22, %c0_23] : memref<16x128xbf16, #tpu.memory_space<vmem>>, vector<16x128xbf16>
    %38 = arith.truncf %28 : vector<128x256xf32> to vector<128x256xbf16>
    %cst_24 = arith.constant dense<0.000000e+00> : vector<16x256xf32>
    %39 = tpu.matmul %37, %38, %cst_24 {dimension_numbers = #tpu.dot_dimension_numbers<[1], [0], [0], [1], [0, 0, 1, 1], [], []>} : vector<16x128xbf16>, vector<128x256xbf16>, vector<16x256xf32> -> vector<16x256xf32>
    %40 = arith.addf %36, %39 : vector<16x256xf32>
    %c0_25 = arith.constant 0 : index
    %c0_26 = arith.constant 0 : index
    %41 = vector.load %arg9[%c0_25, %c0_26] : memref<16x1xf32, #tpu.memory_space<vmem>>, vector<16x1xf32>
    %42 = vector.broadcast %41 : vector<16x1xf32> to vector<16x256xf32>
    %43 = arith.addf %40, %42 : vector<16x256xf32>
    %cst_27 = arith.constant 0.000000e+00 : f32
    %44 = vector.broadcast %cst_27 : f32 to vector<16x256xf32>
    %45 = arith.maximumf %43, %44 : vector<16x256xf32>
    %c0_28 = arith.constant 0 : index
    %c0_29 = arith.constant 0 : index
    %46 = vector.load %arg10[%c0_28, %c0_29] : memref<16x1xf32, #tpu.memory_space<vmem>>, vector<16x1xf32>
    %47 = vector.broadcast %46 : vector<16x1xf32> to vector<16x256xf32>
    %48 = arith.mulf %45, %47 : vector<16x256xf32>
    %cst_30 = arith.constant dense<0.000000e+00> : vector<256xf32>
    %49 = vector.multi_reduction <add>, %48, %cst_30 [0] : vector<16x256xf32> to vector<256xf32>
    %50 = vector.shape_cast %49 : vector<256xf32> to vector<1x256xf32>
    %c0_31 = arith.constant 0 : index
    %c0_32 = arith.constant 0 : index
    %51 = vector.load %arg11[%c0_31, %c0_32] : memref<1x1xf32, #tpu.memory_space<vmem>>, vector<1x1xf32>
    %52 = vector.broadcast %51 : vector<1x1xf32> to vector<1x256xf32>
    %53 = arith.addf %50, %52 : vector<1x256xf32>
    %54 = arith.negf %53 : vector<1x256xf32>
    %55 = math.exp %54 : vector<1x256xf32>
    %cst_33 = arith.constant 1.000000e+00 : f32
    %56 = vector.broadcast %cst_33 : f32 to vector<1x256xf32>
    %57 = arith.addf %56, %55 : vector<1x256xf32>
    %58 = arith.divf %56, %57 : vector<1x256xf32>
    %59 = vector.broadcast %58 : vector<1x256xf32> to vector<16x256xf32>
    %60 = arith.mulf %59, %1 : vector<16x256xf32>
    %c0_34 = arith.constant 0 : index
    %c0_35 = arith.constant 0 : index
    %c0_36 = arith.constant 0 : index
    %61 = vector.load %arg12[%c0_34, %c0_35, %c0_36] : memref<1x16x256xf32, #tpu.memory_space<vmem>>, vector<1x16x256xf32>
    %62 = vector.shape_cast %61 : vector<1x16x256xf32> to vector<16x256xf32>
    %63 = vector.shape_cast %60 : vector<16x256xf32> to vector<1x16x256xf32>
    tpu.vector_store %arg12[%c0_34, %c0_35, %c0_36], %63 {strides = array<i32>} : memref<1x16x256xf32, #tpu.memory_space<vmem>>, vector<1x16x256xf32>,
    return
  }
  func.func @transform_0(%arg0: i32) -> (i32, i32, i32) {
    %c0_i32 = arith.constant 0 : i32
    %c0_i32_0 = arith.constant 0 : i32
    %c0_i32_1 = arith.constant 0 : i32
    return %arg0, %c0_i32, %c0_i32_0 : i32, i32, i32
  }
  func.func @transform_1(%arg0: i32) -> (i32, i32) {
    %c0_i32 = arith.constant 0 : i32
    %c0_i32_0 = arith.constant 0 : i32
    %c0_i32_1 = arith.constant 0 : i32
    return %c0_i32, %c0_i32_0 : i32, i32
  }
  func.func @transform_2(%arg0: i32) -> (i32, i32) {
    %c0_i32 = arith.constant 0 : i32
    %c0_i32_0 = arith.constant 0 : i32
    %c0_i32_1 = arith.constant 0 : i32
    return %c0_i32, %c0_i32_0 : i32, i32
  }
  func.func @transform_3(%arg0: i32) -> (i32, i32) {
    %c0_i32 = arith.constant 0 : i32
    %c0_i32_0 = arith.constant 0 : i32
    %c0_i32_1 = arith.constant 0 : i32
    return %c0_i32, %c0_i32_0 : i32, i32
  }
  func.func @transform_4(%arg0: i32) -> (i32, i32) {
    %c0_i32 = arith.constant 0 : i32
    %c0_i32_0 = arith.constant 0 : i32
    %c0_i32_1 = arith.constant 0 : i32
    return %c0_i32, %c0_i32_0 : i32, i32
  }
  func.func @transform_5(%arg0: i32) -> (i32, i32) {
    %c0_i32 = arith.constant 0 : i32
    %c0_i32_0 = arith.constant 0 : i32
    %c0_i32_1 = arith.constant 0 : i32
    return %c0_i32, %c0_i32_0 : i32, i32
  }
  func.func @transform_6(%arg0: i32) -> (i32, i32) {
    %c0_i32 = arith.constant 0 : i32
    %c0_i32_0 = arith.constant 0 : i32
    %c0_i32_1 = arith.constant 0 : i32
    return %c0_i32, %c0_i32_0 : i32, i32
  }
  func.func @transform_7(%arg0: i32) -> (i32, i32) {
    %c0_i32 = arith.constant 0 : i32
    %c0_i32_0 = arith.constant 0 : i32
    %c0_i32_1 = arith.constant 0 : i32
    return %c0_i32, %c0_i32_0 : i32, i32
  }
  func.func @transform_8(%arg0: i32) -> (i32, i32) {
    %c0_i32 = arith.constant 0 : i32
    %c0_i32_0 = arith.constant 0 : i32
    %c0_i32_1 = arith.constant 0 : i32
    return %c0_i32, %c0_i32_0 : i32, i32
  }
  func.func @transform_9(%arg0: i32) -> (i32, i32) {
    %c0_i32 = arith.constant 0 : i32
    %c0_i32_0 = arith.constant 0 : i32
    %c0_i32_1 = arith.constant 0 : i32
    return %c0_i32, %c0_i32_0 : i32, i32
  }
  func.func @transform_10(%arg0: i32) -> (i32, i32) {
    %c0_i32 = arith.constant 0 : i32
    %c0_i32_0 = arith.constant 0 : i32
    %c0_i32_1 = arith.constant 0 : i32
    return %c0_i32, %c0_i32_0 : i32, i32
  }
  func.func @transform_11(%arg0: i32) -> (i32, i32, i32) {
    %c0_i32 = arith.constant 0 : i32
    %c0_i32_0 = arith.constant 0 : i32
    %c0_i32_1 = arith.constant 0 : i32
    return %arg0, %c0_i32, %c0_i32_0 : i32, i32, i32
  }
}

</mosaic_0001>

<llo_original>
// kernel: tpu_custom_call.1
$region0: #{tpu_custom_call.1}
  #allocation0 [shape = 'u32[]', space=smem, size = 0x4, offset = 0x4, fixed_abs, tag = 'smem constant byte address 0x4 - core index']
  #allocation1 [shape = 'u32[144,128]{1,0:T(1,128)}', space=vmem, size = 0x12000, scoped, tag = 'internal scratch']
  #allocation2 [shape = 'f32[1,1]{1,0:T(1,128)S(1)}', space=vmem, size = 0x200, scoped, tag = 'scoped memory for tpu_custom_call.1']
  %s0 = inlined_call_operand.vmem [shape: f32[2,16,256], index: 0, kind: input, shape index: {}]
  %s1 = inlined_call_operand.vmem [shape: bf16[24,16], index: 1, kind: input, shape index: {}]
  %s2 = inlined_call_operand.vmem [shape: f32[24,1], index: 2, kind: input, shape index: {}]
  %s3 = inlined_call_operand.vmem [shape: bf16[128,256], index: 3, kind: input, shape index: {}]
  %s4 = inlined_call_operand.hbm [shape: bf16[128,256], index: 4, kind: input, shape index: {}]
  %s5 = inlined_call_operand.vmem [shape: f32[128,1], index: 5, kind: input, shape index: {}]
  %s6 = inlined_call_operand.vmem [shape: f32[16,1], index: 6, kind: input, shape index: {}]
  %s7 = inlined_call_operand.vmem [shape: bf16[16,128], index: 7, kind: input, shape index: {}]
  %s8 = inlined_call_operand.vmem [shape: f32[16,1], index: 8, kind: input, shape index: {}]
  %s9 = inlined_call_operand.vmem [shape: f32[16,1], index: 9, kind: input, shape index: {}]
  %s10 = inlined_call_operand.<no memory space> [shape: f32[1,1], index: 10, kind: input, shape index: {}]
  %s11 = inlined_call_operand.hbm [shape: f32[2,16,256], index: 11, kind: output, shape index: {}]
  %s12 = sld [smem:[#allocation0]]
  $region81: #{tpu_custom_call.1} parent=0
    _
  %s14 = ssub.s32 1, %s12
  %s15 = scalar_select 0, %s14, %s12
  %v16 = vstv %s10
  %17 = vst [vmem:[#allocation2] sm:$0x1] %v16
  $region1: #{tpu_custom_call.1} parent=0
    #allocation3 [shape = 'u8[65536]{0}', space=vmem, size = 0x10000, scoped, tag = 'input window, operand 4, single buffered']
    #allocation4 [shape = 's32[2]{0}', space=sflag, size = 0x8, scoped, tag = 'scoped memory for tpu_custom_call.1']
    #allocation5 [shape = 's32[2]{0}', space=sflag, size = 0x8, scoped, tag = 'scoped memory for tpu_custom_call.1']
    #allocation6 [shape = 'u8[32768]{0}', space=vmem, size = 0x8000, scoped, tag = 'output window, operand 0']
    %18 = vsyncpa [#allocation4], 0
    %19 = vsyncpa [#allocation5], 0
    %s20 = scalar_lea.sflag [#allocation5], 1
    %21 = vsyncpa %s20, 0
    loop: start=0, step=1, limit=4
    $region2: #{tpu_custom_call.1} parent=1 // loop_pre_header
      _
    $region3: #{tpu_custom_call.1} parent=1 // loop_header
      %s23 = sphi 0, %s27
      %p24 = scmp.ge.s32.totalorder %s23, 4
      %s33 = sphi 0, %s35
      %s36 = sphi 0, %s33
      %s37 = sphi 0, %s36
      %s53 = sphi 0, %s37
      %s57 = sphi 0, %s57
      %s59 = sphi 0, %s57
      %s60 = sphi 0, %s59
      %s74 = sphi 0, %s60
      %s78 = sphi 0, %s78
      %s80 = sphi 0, %s78
      %s81 = sphi 0, %s80
      %s95 = sphi 0, %s81
      %s99 = sphi 0, %s99
      %s101 = sphi 0, %s99
      %s102 = sphi 0, %s101
      %s116 = sphi 0, %s102
      %s120 = sphi 0, %s120
      %s122 = sphi 0, %s120
      %s123 = sphi 0, %s122
      %s137 = sphi 0, %s123
      %s141 = sphi 0, %s141
      %s143 = sphi 0, %s141
      %s144 = sphi 0, %s143
      %s158 = sphi 0, %s144
      %s162 = sphi 0, %s162
      %s164 = sphi 0, %s162
      %s165 = sphi 0, %s164
      %s179 = sphi 0, %s165
      %s183 = sphi 0, %s183
      %s185 = sphi 0, %s183
      %s186 = sphi 0, %s185
      %s200 = sphi 0, %s186
      %s204 = sphi 0, %s204
      %s206 = sphi 0, %s204
      %s207 = sphi 0, %s206
      %s221 = sphi 0, %s207
      %s225 = sphi 0, %s225
      %s227 = sphi 0, %s225
      %s228 = sphi 0, %s227
      %s242 = sphi 0, %s228
      %s246 = sphi 0, %s246
      %s248 = sphi 0, %s246
      %s249 = sphi 0, %s248
      %s263 = sphi 0, %s249
      %s269 = sphi 0, %s271
      %s272 = sphi 0, %s269
      %s273 = sphi 0, %s272
      %s289 = sphi 0, %s273
    $region4: #{tpu_custom_call.1} parent=1 // loop_header_branch
      %26 = sbr.rel (%p24) target = $region8
    $region5: #{tpu_custom_call.1} parent=1 // loop_body
      %s28 = ssub.s32 %s23, 1
      %s29 = ssub.s32 %s23, 2
      %s30 = sadd.s32 %s23, 1
      %s31 = ssub.s32 %s23, %s30
      %p32 = scmp.eq.s32.totalorder %s31, 0
      %s34 = sadd.s32 %s33, 1
      %s35 = scalar_select %p32, %s33, %s34
      %p38 = pneg %p32
      %p39 = scmp.eq.s32.totalorder %s23, 1
      %p40 = por %p38, %p39
      %p41 = scmp.ne.s32.totalorder %s33, %s36
      %p42 = scmp.eq.s32.totalorder %s23, 0
      %p43 = por %p41, %p42
      %p44 = scmp.ne.s32.totalorder %s33, %s36
      %p45 = scmp.eq.s32.totalorder %s28, 1
      %p46 = por %p44, %p45
      %p47 = scmp.ne.s32.totalorder %s36, %s37
      %p48 = scmp.eq.s32.totalorder %s28, 0
      %p49 = por %p47, %p48
      %p50 = scmp.ne.s32.totalorder %s36, %s37
      %p51 = scmp.eq.s32.totalorder %s29, 1
      %p52 = por %p50, %p51
      %p54 = scmp.ne.s32.totalorder %s37, %s53
      %p55 = scmp.eq.s32.totalorder %s29, 0
      %p56 = por %p54, %p55
      %s58 = sadd.s32 %s57, 1
      %p61 = scmp.eq.s32.totalorder %s23, 1
      %p62 = scmp.ne.s32.totalorder %s57, %s59
      %p63 = scmp.eq.s32.totalorder %s23, 0
      %p64 = por %p62, %p63
      %p65 = scmp.ne.s32.totalorder %s57, %s59
      %p66 = scmp.eq.s32.totalorder %s28, 1
      %p67 = por %p65, %p66
      %p68 = scmp.ne.s32.totalorder %s59, %s60
      %p69 = scmp.eq.s32.totalorder %s28, 0
      %p70 = por %p68, %p69
      %p71 = scmp.ne.s32.totalorder %s59, %s60
      %p72 = scmp.eq.s32.totalorder %s29, 1
      %p73 = por %p71, %p72
      %p75 = scmp.ne.s32.totalorder %s60, %s74
      %p76 = scmp.eq.s32.totalorder %s29, 0
      %p77 = por %p75, %p76
      %s79 = sadd.s32 %s78, 1
      %p82 = scmp.eq.s32.totalorder %s23, 1
      %p83 = scmp.ne.s32.totalorder %s78, %s80
      %p84 = scmp.eq.s32.totalorder %s23, 0
      %p85 = por %p83, %p84
      %p86 = scmp.ne.s32.totalorder %s78, %s80
      %p87 = scmp.eq.s32.totalorder %s28, 1
      %p88 = por %p86, %p87
      %p89 = scmp.ne.s32.totalorder %s80, %s81
      %p90 = scmp.eq.s32.totalorder %s28, 0
      %p91 = por %p89, %p90
      %p92 = scmp.ne.s32.totalorder %s80, %s81
      %p93 = scmp.eq.s32.totalorder %s29, 1
      %p94 = por %p92, %p93
      %p96 = scmp.ne.s32.totalorder %s81, %s95
      %p97 = scmp.eq.s32.totalorder %s29, 0
      %p98 = por %p96, %p97
      %s100 = sadd.s32 %s99, 1
      %p103 = scmp.eq.s32.totalorder %s23, 1
      %p104 = scmp.ne.s32.totalorder %s99, %s101
      %p105 = scmp.eq.s32.totalorder %s23, 0
      %p106 = por %p104, %p105
      %p107 = scmp.ne.s32.totalorder %s99, %s101
      %p108 = scmp.eq.s32.totalorder %s28, 1
      %p109 = por %p107, %p108
      %p110 = scmp.ne.s32.totalorder %s101, %s102
      %p111 = scmp.eq.s32.totalorder %s28, 0
      %p112 = por %p110, %p111
      %p113 = scmp.ne.s32.totalorder %s101, %s102
      %p114 = scmp.eq.s32.totalorder %s29, 1
      %p115 = por %p113, %p114
      %p117 = scmp.ne.s32.totalorder %s102, %s116
      %p118 = scmp.eq.s32.totalorder %s29, 0
      %p119 = por %p117, %p118
      %s121 = sadd.s32 %s120, 1
      %p124 = scmp.eq.s32.totalorder %s23, 1
      %p125 = scmp.ne.s32.totalorder %s120, %s122
      %p126 = scmp.eq.s32.totalorder %s23, 0
      %p127 = por %p125, %p126
      %p128 = scmp.ne.s32.totalorder %s120, %s122
      %p129 = scmp.eq.s32.totalorder %s28, 1
      %p130 = por %p128, %p129
      %p131 = scmp.ne.s32.totalorder %s122, %s123
      %p132 = scmp.eq.s32.totalorder %s28, 0
      %p133 = por %p131, %p132
      %p134 = scmp.ne.s32.totalorder %s122, %s123
      %p135 = scmp.eq.s32.totalorder %s29, 1
      %p136 = por %p134, %p135
      %p138 = scmp.ne.s32.totalorder %s123, %s137
      %p139 = scmp.eq.s32.totalorder %s29, 0
      %p140 = por %p138, %p139
      %s142 = sadd.s32 %s141, 1
      %p145 = scmp.eq.s32.totalorder %s23, 1
      %p146 = scmp.ne.s32.totalorder %s141, %s143
      %p147 = scmp.eq.s32.totalorder %s23, 0
      %p148 = por %p146, %p147
      %p149 = scmp.ne.s32.totalorder %s141, %s143
      %p150 = scmp.eq.s32.totalorder %s28, 1
      %p151 = por %p149, %p150
      %p152 = scmp.ne.s32.totalorder %s143, %s144
      %p153 = scmp.eq.s32.totalorder %s28, 0
      %p154 = por %p152, %p153
      %p155 = scmp.ne.s32.totalorder %s143, %s144
      %p156 = scmp.eq.s32.totalorder %s29, 1
      %p157 = por %p155, %p156
      %p159 = scmp.ne.s32.totalorder %s144, %s158
      %p160 = scmp.eq.s32.totalorder %s29, 0
      %p161 = por %p159, %p160
      %s163 = sadd.s32 %s162, 1
      %p166 = scmp.eq.s32.totalorder %s23, 1
      %p167 = scmp.ne.s32.totalorder %s162, %s164
      %p168 = scmp.eq.s32.totalorder %s23, 0
      %p169 = por %p167, %p168
      %p170 = scmp.ne.s32.totalorder %s162, %s164
      %p171 = scmp.eq.s32.totalorder %s28, 1
      %p172 = por %p170, %p171
      %p173 = scmp.ne.s32.totalorder %s164, %s165
      %p174 = scmp.eq.s32.totalorder %s28, 0
      %p175 = por %p173, %p174
      %p176 = scmp.ne.s32.totalorder %s164, %s165
      %p177 = scmp.eq.s32.totalorder %s29, 1
      %p178 = por %p176, %p177
      %p180 = scmp.ne.s32.totalorder %s165, %s179
      %p181 = scmp.eq.s32.totalorder %s29, 0
      %p182 = por %p180, %p181
      %s184 = sadd.s32 %s183, 1
      %p187 = scmp.eq.s32.totalorder %s23, 1
      %p188 = scmp.ne.s32.totalorder %s183, %s185
      %p189 = scmp.eq.s32.totalorder %s23, 0
      %p190 = por %p188, %p189
      %p191 = scmp.ne.s32.totalorder %s183, %s185
      %p192 = scmp.eq.s32.totalorder %s28, 1
      %p193 = por %p191, %p192
      %p194 = scmp.ne.s32.totalorder %s185, %s186
      %p195 = scmp.eq.s32.totalorder %s28, 0
      %p196 = por %p194, %p195
      %p197 = scmp.ne.s32.totalorder %s185, %s186
      %p198 = scmp.eq.s32.totalorder %s29, 1
      %p199 = por %p197, %p198
      %p201 = scmp.ne.s32.totalorder %s186, %s200
      %p202 = scmp.eq.s32.totalorder %s29, 0
      %p203 = por %p201, %p202
      %s205 = sadd.s32 %s204, 1
      %p208 = scmp.eq.s32.totalorder %s23, 1
      %p209 = scmp.ne.s32.totalorder %s204, %s206
      %p210 = scmp.eq.s32.totalorder %s23, 0
      %p211 = por %p209, %p210
      %p212 = scmp.ne.s32.totalorder %s204, %s206
      %p213 = scmp.eq.s32.totalorder %s28, 1
      %p214 = por %p212, %p213
      %p215 = scmp.ne.s32.totalorder %s206, %s207
      %p216 = scmp.eq.s32.totalorder %s28, 0
      %p217 = por %p215, %p216
      %p218 = scmp.ne.s32.totalorder %s206, %s207
      %p219 = scmp.eq.s32.totalorder %s29, 1
      %p220 = por %p218, %p219
      %p222 = scmp.ne.s32.totalorder %s207, %s221
      %p223 = scmp.eq.s32.totalorder %s29, 0
      %p224 = por %p222, %p223
      %s226 = sadd.s32 %s225, 1
      %p229 = scmp.eq.s32.totalorder %s23, 1
      %p230 = scmp.ne.s32.totalorder %s225, %s227
      %p231 = scmp.eq.s32.totalorder %s23, 0
      %p232 = por %p230, %p231
      %p233 = scmp.ne.s32.totalorder %s225, %s227
      %p234 = scmp.eq.s32.totalorder %s28, 1
      %p235 = por %p233, %p234
      %p236 = scmp.ne.s32.totalorder %s227, %s228
      %p237 = scmp.eq.s32.totalorder %s28, 0
      %p238 = por %p236, %p237
      %p239 = scmp.ne.s32.totalorder %s227, %s228
      %p240 = scmp.eq.s32.totalorder %s29, 1
      %p241 = por %p239, %p240
      %p243 = scmp.ne.s32.totalorder %s228, %s242
      %p244 = scmp.eq.s32.totalorder %s29, 0
      %p245 = por %p243, %p244
      %s247 = sadd.s32 %s246, 1
      %p250 = scmp.eq.s32.totalorder %s23, 1
      %p251 = scmp.ne.s32.totalorder %s246, %s248
      %p252 = scmp.eq.s32.totalorder %s23, 0
      %p253 = por %p251, %p252
      %p254 = scmp.ne.s32.totalorder %s246, %s248
      %p255 = scmp.eq.s32.totalorder %s28, 1
      %p256 = por %p254, %p255
      %p257 = scmp.ne.s32.totalorder %s248, %s249
      %p258 = scmp.eq.s32.totalorder %s28, 0
      %p259 = por %p257, %p258
      %p260 = scmp.ne.s32.totalorder %s248, %s249
      %p261 = scmp.eq.s32.totalorder %s29, 1
      %p262 = por %p260, %p261
      %p264 = scmp.ne.s32.totalorder %s249, %s263
      %p265 = scmp.eq.s32.totalorder %s29, 0
      %p266 = por %p264, %p265
      %s267 = ssub.s32 %s23, %s30
      %p268 = scmp.eq.s32.totalorder %s267, 0
      %s270 = sadd.s32 %s269, 1
      %s271 = scalar_select %p268, %s269, %s270
      %p274 = pneg %p268
      %p275 = scmp.eq.s32.totalorder %s23, 1
      %p276 = por %p274, %p275
      %p277 = scmp.ne.s32.totalorder %s269, %s272
      %p278 = scmp.eq.s32.totalorder %s23, 0
      %p279 = por %p277, %p278
      %p280 = scmp.ne.s32.totalorder %s269, %s272
      %p281 = scmp.eq.s32.totalorder %s28, 1
      %p282 = por %p280, %p281
      %p283 = scmp.ne.s32.totalorder %s272, %s273
      %p284 = scmp.eq.s32.totalorder %s28, 0
      %p285 = por %p283, %p284
      %p286 = scmp.ne.s32.totalorder %s272, %s273
      %p287 = scmp.eq.s32.totalorder %s29, 1
      %p288 = por %p286, %p287
      %p290 = scmp.ne.s32.totalorder %s273, %s289
      %p291 = scmp.eq.s32.totalorder %s29, 0
      %p292 = por %p290, %p291
      %p293 = scmp.le.s32.totalorder 1, %s23
      %p294 = scmp.lt.s32.totalorder %s23, 3
      %p295 = pnand %p293, %p294
      %p296 = pneg %p295
      // Predicated region
      $region9: #{tpu_custom_call.1} parent=5 // pred_check
        _
      $region10: #{tpu_custom_call.1} parent=5 // pred_check_branch
        %298 = sbr.rel (%p295) target = $region12
      $region11: #{tpu_custom_call.1} parent=5 // pred_region
        %s299 = ssub.s32 %s23, 1
        // Predicated region
        $region13: #{tpu_custom_call.1} parent=11 // pred_check
          %p300 = pneg %p70
        $region14: #{tpu_custom_call.1} parent=11 // pred_check_branch
          %302 = sbr.rel (%p300) target = $region16
        $region15: #{tpu_custom_call.1} parent=11 // pred_region
          _
        $region16: #{tpu_custom_call.1} parent=11 // pred_fallthru
          _
        // Predicated region
        $region17: #{tpu_custom_call.1} parent=11 // pred_check
          %p303 = pneg %p91
        $region18: #{tpu_custom_call.1} parent=11 // pred_check_branch
          %305 = sbr.rel (%p303) target = $region20
        $region19: #{tpu_custom_call.1} parent=11 // pred_region
          _
        $region20: #{tpu_custom_call.1} parent=11 // pred_fallthru
          _
        // Predicated region
        $region21: #{tpu_custom_call.1} parent=11 // pred_check
          %p306 = pneg %p112
        $region22: #{tpu_custom_call.1} parent=11 // pred_check_branch
          %308 = sbr.rel (%p306) target = $region24
        $region23: #{tpu_custom_call.1} parent=11 // pred_region
          _
        $region24: #{tpu_custom_call.1} parent=11 // pred_fallthru
          _
        // Predicated region
        $region25: #{tpu_custom_call.1} parent=11 // pred_check
          %p309 = pneg %p133
        $region26: #{tpu_custom_call.1} parent=11 // pred_check_branch
          %311 = sbr.rel (%p309) target = $region28
        $region27: #{tpu_custom_call.1} parent=11 // pred_region
          %s313 = ssub.s32 2048, 2048
          %314 = vsyncadd [#allocation4], %s313
          %s315 = sshll.u32 [#allocation3], 4
          %s316 = int_to_ptr.vmem [resolvable:$true] %s315
          %321 = dma.hbm_to_vmem [thread:$0]  %s4, 2048, %s316, [#allocation4], 128, 128, 8
        $region28: #{tpu_custom_call.1} parent=11 // pred_fallthru
          _
        // Predicated region
        $region29: #{tpu_custom_call.1} parent=11 // pred_check
          %p322 = pneg %p154
        $region30: #{tpu_custom_call.1} parent=11 // pred_check_branch
          %324 = sbr.rel (%p322) target = $region32
        $region31: #{tpu_custom_call.1} parent=11 // pred_region
          _
        $region32: #{tpu_custom_call.1} parent=11 // pred_fallthru
          _
        // Predicated region
        $region33: #{tpu_custom_call.1} parent=11 // pred_check
          %p325 = pneg %p175
        $region34: #{tpu_custom_call.1} parent=11 // pred_check_branch
          %327 = sbr.rel (%p325) target = $region36
        $region35: #{tpu_custom_call.1} parent=11 // pred_region
          _
        $region36: #{tpu_custom_call.1} parent=11 // pred_fallthru
          _
        // Predicated region
        $region37: #{tpu_custom_call.1} parent=11 // pred_check
          %p328 = pneg %p196
        $region38: #{tpu_custom_call.1} parent=11 // pred_check_branch
          %330 = sbr.rel (%p328) target = $region40
        $region39: #{tpu_custom_call.1} parent=11 // pred_region
          _
        $region40: #{tpu_custom_call.1} parent=11 // pred_fallthru
          _
        // Predicated region
        $region41: #{tpu_custom_call.1} parent=11 // pred_check
          %p331 = pneg %p217
        $region42: #{tpu_custom_call.1} parent=11 // pred_check_branch
          %333 = sbr.rel (%p331) target = $region44
        $region43: #{tpu_custom_call.1} parent=11 // pred_region
          _
        $region44: #{tpu_custom_call.1} parent=11 // pred_fallthru
          _
        // Predicated region
        $region45: #{tpu_custom_call.1} parent=11 // pred_check
          %p334 = pneg %p238
        $region46: #{tpu_custom_call.1} parent=11 // pred_check_branch
          %336 = sbr.rel (%p334) target = $region48
        $region47: #{tpu_custom_call.1} parent=11 // pred_region
          _
        $region48: #{tpu_custom_call.1} parent=11 // pred_fallthru
          _
        // Predicated region
        $region49: #{tpu_custom_call.1} parent=11 // pred_check
          %p337 = pneg %p259
        $region50: #{tpu_custom_call.1} parent=11 // pred_check_branch
          %339 = sbr.rel (%p337) target = $region52
        $region51: #{tpu_custom_call.1} parent=11 // pred_region
          _
        $region52: #{tpu_custom_call.1} parent=11 // pred_fallthru
          _
      $region12: #{tpu_custom_call.1} parent=5 // pred_fallthru
        _
      %p340 = scmp.lt.s32.totalorder %s23, 2
      // Predicated region
      $region53: #{tpu_custom_call.1} parent=5 // pred_check
        %p341 = pneg %p340
      $region54: #{tpu_custom_call.1} parent=5 // pred_check_branch
        %343 = sbr.rel (%p341) target = $region56
      $region55: #{tpu_custom_call.1} parent=5 // pred_region
        // Predicated region
        $region57: #{tpu_custom_call.1} parent=55 // pred_check
          %p344 = pneg %p43
        $region58: #{tpu_custom_call.1} parent=55 // pred_check_branch
          %346 = sbr.rel (%p344) target = $region60
        $region59: #{tpu_custom_call.1} parent=55 // pred_region
          %p347 = scmp.lt.s32.totalorder %s23, 1
          %s348 = scalar_select %p347, %s23, 1
          %s349 = smul.addr %s348, 4
          %s350 = smul.addr %s349, 8
          %s351 = scalar_lea.vmem %s0, %s350
        $region60: #{tpu_custom_call.1} parent=55 // pred_fallthru
          _
      $region56: #{tpu_custom_call.1} parent=5 // pred_fallthru
        _
      %p352 = scmp.le.s32.totalorder 1, %s23
      %p353 = scmp.lt.s32.totalorder %s23, 3
      %p354 = pnand %p352, %p353
      %p355 = pneg %p354
      // Predicated region
      $region61: #{tpu_custom_call.1} parent=5 // pred_check
        _
      $region62: #{tpu_custom_call.1} parent=5 // pred_check_branch
        %357 = sbr.rel (%p354) target = $region64
      $region63: #{tpu_custom_call.1} parent=5 // pred_region
        %s358 = ssub.s32 %s23, 1
        // Predicated region
        $region65: #{tpu_custom_call.1} parent=63 // pred_check
          %p359 = pneg %p133
        $region66: #{tpu_custom_call.1} parent=63 // pred_check_branch
          %361 = sbr.rel (%p359) target = $region68
        $region67: #{tpu_custom_call.1} parent=63 // pred_region
          %362 = dma.done [#allocation4], 2048
        $region68: #{tpu_custom_call.1} parent=63 // pred_fallthru
          _
        %p363 = scmp.lt.s32.totalorder %s28, 1
        %s364 = scalar_select %p363, %s28, 1
        %s365 = smul.addr %s364, 4
        %s366 = smul.addr %s365, 8
        %s367 = scalar_lea.vmem %s0, %s366
        %p368 = pneg %p49
        %p369 = pneg %p46
        %p370 = pneg %p70
        %p371 = pneg %p67
        %p372 = pneg %p91
        %p373 = pneg %p88
        %p374 = pneg %p112
        %p375 = pneg %p109
        %p376 = pneg %p133
        %p377 = pneg %p130
        %p378 = pneg %p154
        %p379 = pneg %p151
        %p380 = pneg %p175
        %p381 = pneg %p172
        %p382 = pneg %p196
        %p383 = pneg %p193
        %p384 = pneg %p217
        %p385 = pneg %p214
        %p386 = pneg %p238
        %p387 = pneg %p235
        %p388 = pneg %p259
        %p389 = pneg %p256
        %p390 = pneg %p285
        %p391 = pneg %p282
        %s392 = sand.u32 %s272, 1
        %s393 = scalar_lea.sflag [#allocation5], %s392
        %s394 = sand.u32 %s272, 1
        %s395 = smul.addr %s394, 32
        %s396 = scalar_lea.vmem [#allocation6], %s395
        %p397 = scmp.lt.s32.totalorder %s28, 1
        %s398 = scalar_select %p397, %s28, 1
        %s399 = smul.addr %s398, 4
        %s400 = smul.addr %s399, 8
        %s401 = scalar_lea.vmem %s0, %s400
        %v403 = vld [vmem:[%s401] sm:$0xff]
        %v404 = vld [vmem:[%s401 + $0x8] sm:$0xff]
        %v405 = vld [vmem:[%s401 + $0x10] sm:$0xff]
        %v406 = vld [vmem:[%s401 + $0x18] sm:$0xff]
        %v407 = vld [vmem:[%s1] sm:$0xf]
        %v408 = vld [vmem:[%s1 + $0x4] sm:$0xf]
        %v409 = vld [vmem:[%s1 + $0x8] sm:$0xf]
        %v410 = vpack.c.bf16 %v405, %v403
        %v411 = vpack.c.bf16 %v406, %v404
        %v412 = vld [vmem:[%s2] sm:$0xff]
        %v413 = vld [vmem:[%s2 + $0x8] sm:$0xff]
        %v414 = vld [vmem:[%s2 + $0x10] sm:$0xff]
        %416 = vset.pattern.permute.xlu0 0
        %417 = vperm.xlu0 %416, %v412
        %v418 = vpop.permute.xlu0 %417
        %421 = vset.pattern.permute.xlu0 0
        %422 = vperm.xlu0 %421, %v413
        %v423 = vpop.permute.xlu0 %422
        %426 = vset.pattern.permute.xlu0 0
        %427 = vperm.xlu0 %426, %v414
        %v428 = vpop.permute.xlu0 %427
        %v433 = vunpack.c.l.b16 %v407
        %v434 = vunpack.c.l.b16 %v408
        %v435 = vunpack.c.l.b16 %v409
        %v436 = vpack.c.b16 %v434, %v433
        %v437 = vpack.c.b16 %v435, %v435
        %vm438 = vcmask 130048
        %v440 = vsel %vm438, %v436, 0
        %v443 = vsel %vm438, %v437, 0
        %445 = vmatprep.subr.bf16.mxu0 %v411
        %446 = vmatpush1.bf16.msra.mxu0 %v410
        %447 = vmatprep.subr.bf16.mxu0 0
        %448 = vmatpush1.bf16.msra.mxu0 0
        %449 = vmatprep.subr.bf16.mxu0 0
        %450 = vmatpush1.bf16.msra.mxu0 0
        %451 = vmatprep.subr.bf16.mxu0 0
        %452 = vmatpush1.bf16.msra.mxu0 0
        %453 = vmatprep.subr.bf16.mxu0 0
        %454 = vmatpush1.bf16.msra.mxu0 0
        %455 = vmatprep.subr.bf16.mxu0 0
        %456 = vmatpush1.bf16.msra.mxu0 0
        %457 = vmatprep.subr.bf16.mxu0 0
        %458 = vmatpush1.bf16.msra.mxu0 0
        %459 = vmatprep.subr.bf16.mxu0 0
        %460 = vmatpush1.bf16.msra.mxu0 0
        %461 = vmatprep.subr.bf16.mxu0 0
        %462 = vmatpush1.bf16.msra.mxu0 0
        %463 = vmatprep.subr.bf16.mxu0 0
        %464 = vmatpush1.bf16.msra.mxu0 0
        %465 = vmatprep.subr.bf16.mxu0 0
        %466 = vmatpush1.bf16.msra.mxu0 0
        %467 = vmatprep.subr.bf16.mxu0 0
        %468 = vmatpush1.bf16.msra.mxu0 0
        %469 = vmatprep.subr.bf16.mxu0 0
        %470 = vmatpush1.bf16.msra.mxu0 0
        %471 = vmatprep.subr.bf16.mxu0 0
        %472 = vmatpush1.bf16.msra.mxu0 0
        %473 = vmatprep.subr.bf16.mxu0 0
        %474 = vmatpush1.bf16.msra.mxu0 0
        %475 = vmatprep.subr.bf16.mxu0 0
        %476 = vmatpush1.bf16.msra.mxu0 0
        %477 = vmatprep.mubr.bf16.mxu0 0
        %478 = vmatmul.mubr.bf16.gmra.mrb[0].mxu0 %v440
        %v479 = vpop.f32.mrb[0].mxu0
        %v480 = vadd.f32 %v418, %v479
        %v481 = vpop.f32.mrb[0].mxu0
        %v482 = vadd.f32 %v418, %v481
        %v483 = vpop.f32.mrb[0].mxu0
        %v484 = vadd.f32 %v423, %v483
        %v485 = vpop.f32.mrb[0].mxu0
        %v486 = vadd.f32 %v423, %v485
        %487 = vmatprep.mubr.bf16.mxu0 0
        %488 = vmatmul.mubr.bf16.gmra.mrb[0].mxu0 %v443
        %v489 = vpop.f32.mrb[0].mxu0
        %v490 = vadd.f32 %v428, %v489
        %v491 = vpop.f32.mrb[0].mxu0
        %v492 = vadd.f32 %v428, %v491
        %v493 = vpop.f32.mrb[0].mxu0
        %v494 = vpop.f32.mrb[0].mxu0
        %495 = vdwg.mxu0
        %v496 = vmax.f32 %v480, 0.0
        %v497 = vmax.f32 %v482, 0.0
        %v498 = vmax.f32 %v484, 0.0
        %v499 = vmax.f32 %v486, 0.0
        %v500 = vmax.f32 %v490, 0.0
        %v501 = vmax.f32 %v492, 0.0
        %v502 = vpack.c.bf16 %v496, %v496
        %v503 = vpack.c.bf16 %v497, %v497
        %v504 = vpack.c.bf16 %v498, %v498
        %v505 = vpack.c.bf16 %v499, %v499
        %v506 = vld [vmem:[%s3] sm:$0xff]
        %v507 = vld [vmem:[%s3 + $0x8] sm:$0xff]
        %v508 = vld [vmem:[%s3 + $0x10] sm:$0xff]
        %v509 = vld [vmem:[%s3 + $0x18] sm:$0xff]
        %v510 = vld [vmem:[%s3 + $0x20] sm:$0xff]
        %v511 = vld [vmem:[%s3 + $0x28] sm:$0xff]
        %v512 = vld [vmem:[%s3 + $0x30] sm:$0xff]
        %v513 = vld [vmem:[%s3 + $0x38] sm:$0xff]
        %v514 = vld [vmem:[%s3 + $0x40] sm:$0xff]
        %v515 = vld [vmem:[%s3 + $0x48] sm:$0xff]
        %v516 = vld [vmem:[%s3 + $0x50] sm:$0xff]
        %v517 = vld [vmem:[%s3 + $0x58] sm:$0xff]
        %v518 = vld [vmem:[%s3 + $0x60] sm:$0xff]
        %v519 = vld [vmem:[%s3 + $0x68] sm:$0xff]
        %v520 = vld [vmem:[%s3 + $0x70] sm:$0xff]
        %v521 = vld [vmem:[%s3 + $0x78] sm:$0xff]
        %v538 = vunpack.c.l.b16 %v506
        %v539 = vunpack.c.h.b16 %v506
        %v540 = vunpack.c.l.b16 %v507
        %v541 = vunpack.c.h.b16 %v507
        %v542 = vunpack.c.l.b16 %v508
        %v543 = vunpack.c.h.b16 %v508
        %v544 = vunpack.c.l.b16 %v509
        %v545 = vunpack.c.h.b16 %v509
        %v546 = vunpack.c.l.b16 %v510
        %v547 = vunpack.c.h.b16 %v510
        %v548 = vunpack.c.l.b16 %v511
        %v549 = vunpack.c.h.b16 %v511
        %v550 = vunpack.c.l.b16 %v512
        %v551 = vunpack.c.h.b16 %v512
        %v552 = vunpack.c.l.b16 %v513
        %v553 = vunpack.c.h.b16 %v513
        %v554 = vunpack.c.l.b16 %v514
        %v555 = vunpack.c.h.b16 %v514
        %v556 = vunpack.c.l.b16 %v515
        %v557 = vunpack.c.h.b16 %v515
        %v558 = vunpack.c.l.b16 %v516
        %v559 = vunpack.c.h.b16 %v516
        %v560 = vunpack.c.l.b16 %v517
        %v561 = vunpack.c.h.b16 %v517
        %v562 = vunpack.c.l.b16 %v518
        %v563 = vunpack.c.h.b16 %v518
        %v564 = vunpack.c.l.b16 %v519
        %v565 = vunpack.c.h.b16 %v519
        %v566 = vunpack.c.l.b16 %v520
        %v567 = vunpack.c.h.b16 %v520
        %v568 = vunpack.c.l.b16 %v521
        %v569 = vunpack.c.h.b16 %v521
        %v570 = vpack.c.b16 %v540, %v538
        %v571 = vpack.c.b16 %v541, %v539
        %v572 = vpack.c.b16 %v544, %v542
        %v573 = vpack.c.b16 %v545, %v543
        %v574 = vpack.c.b16 %v548, %v546
        %v575 = vpack.c.b16 %v549, %v547
        %v576 = vpack.c.b16 %v552, %v550
        %v577 = vpack.c.b16 %v553, %v551
        %v578 = vpack.c.b16 %v556, %v554
        %v579 = vpack.c.b16 %v557, %v555
        %v580 = vpack.c.b16 %v560, %v558
        %v581 = vpack.c.b16 %v561, %v559
        %v582 = vpack.c.b16 %v564, %v562
        %v583 = vpack.c.b16 %v565, %v563
        %v584 = vpack.c.b16 %v568, %v566
        %v585 = vpack.c.b16 %v569, %v567
        %602 = vmatprep.subr.bf16.mxu0 %v505
        %603 = vmatpush1.bf16.xpose.msra.mxu0 %v504
        %604 = vmatprep.subr.bf16.mxu0 0
        %605 = vmatpush1.bf16.xpose.msra.mxu0 0
        %606 = vmatprep.subr.bf16.mxu0 0
        %607 = vmatpush1.bf16.xpose.msra.mxu0 0
        %608 = vmatprep.subr.bf16.mxu0 0
        %609 = vmatpush1.bf16.xpose.msra.mxu0 0
        %610 = vmatprep.subr.bf16.mxu0 0
        %611 = vmatpush1.bf16.xpose.msra.mxu0 0
        %612 = vmatprep.subr.bf16.mxu0 0
        %613 = vmatpush1.bf16.xpose.msra.mxu0 0
        %614 = vmatprep.subr.bf16.mxu0 0
        %615 = vmatpush1.bf16.xpose.msra.mxu0 0
        %616 = vmatprep.subr.bf16.mxu0 0
        %617 = vmatpush1.bf16.xpose.msra.mxu0 0
        %618 = vmatprep.subr.bf16.mxu0 0
        %619 = vmatpush1.bf16.xpose.msra.mxu0 0
        %620 = vmatprep.subr.bf16.mxu0 0
        %621 = vmatpush1.bf16.xpose.msra.mxu0 0
        %622 = vmatprep.subr.bf16.mxu0 0
        %623 = vmatpush1.bf16.xpose.msra.mxu0 0
        %624 = vmatprep.subr.bf16.mxu0 0
        %625 = vmatpush1.bf16.xpose.msra.mxu0 0
        %626 = vmatprep.subr.bf16.mxu0 0
        %627 = vmatpush1.bf16.xpose.msra.mxu0 0
        %628 = vmatprep.subr.bf16.mxu0 0
        %629 = vmatpush1.bf16.xpose.msra.mxu0 0
        %630 = vmatprep.subr.bf16.mxu0 0
        %631 = vmatpush1.bf16.xpose.msra.mxu0 0
        %632 = vmatprep.subr.bf16.mxu0 0
        %633 = vmatpush1.bf16.xpose.msra.mxu0 0
        %634 = vmatprep.mubr.bf16.mxu0 %v571
        %635 = vmatmul.mubr.bf16.gmra.mrb[0].mxu0 %v570
        %v636 = vpop.f32.mrb[0].mxu0
        %v637 = vadd.f32 0.0, %v636
        %v638 = vpop.f32.mrb[0].mxu0
        %v639 = vpop.f32.mrb[0].mxu0
        %v640 = vadd.f32 0.0, %v639
        %v641 = vpop.f32.mrb[0].mxu0
        %642 = vmatprep.mubr.bf16.mxu0 %v573
        %643 = vmatmul.mubr.bf16.gmra.mrb[0].mxu0 %v572
        %v644 = vpop.f32.mrb[0].mxu0
        %v645 = vadd.f32 0.0, %v644
        %v646 = vpop.f32.mrb[0].mxu0
        %v647 = vpop.f32.mrb[0].mxu0
        %v648 = vadd.f32 0.0, %v647
        %v649 = vpop.f32.mrb[0].mxu0
        %650 = vmatprep.mubr.bf16.mxu0 %v575
        %651 = vmatmul.mubr.bf16.gmra.mrb[0].mxu0 %v574
        %v652 = vpop.f32.mrb[0].mxu0
        %v653 = vadd.f32 0.0, %v652
        %v654 = vpop.f32.mrb[0].mxu0
        %v655 = vpop.f32.mrb[0].mxu0
        %v656 = vadd.f32 0.0, %v655
        %v657 = vpop.f32.mrb[0].mxu0
        %658 = vmatprep.mubr.bf16.mxu0 %v577
        %659 = vmatmul.mubr.bf16.gmra.mrb[0].mxu0 %v576
        %v660 = vpop.f32.mrb[0].mxu0
        %v661 = vadd.f32 0.0, %v660
        %v662 = vpop.f32.mrb[0].mxu0
        %v663 = vpop.f32.mrb[0].mxu0
        %v664 = vadd.f32 0.0, %v663
        %v665 = vpop.f32.mrb[0].mxu0
        %666 = vmatprep.mubr.bf16.mxu0 %v579
        %667 = vmatmul.mubr.bf16.gmra.mrb[0].mxu0 %v578
        %v668 = vpop.f32.mrb[0].mxu0
        %v669 = vadd.f32 0.0, %v668
        %v670 = vpop.f32.mrb[0].mxu0
        %v671 = vpop.f32.mrb[0].mxu0
        %v672 = vadd.f32 0.0, %v671
        %v673 = vpop.f32.mrb[0].mxu0
        %674 = vmatprep.mubr.bf16.mxu0 %v581
        %675 = vmatmul.mubr.bf16.gmra.mrb[0].mxu0 %v580
        %v676 = vpop.f32.mrb[0].mxu0
        %v677 = vadd.f32 0.0, %v676
        %v678 = vpop.f32.mrb[0].mxu0
        %v679 = vpop.f32.mrb[0].mxu0
        %v680 = vadd.f32 0.0, %v679
        %v681 = vpop.f32.mrb[0].mxu0
        %682 = vmatprep.mubr.bf16.mxu0 %v583
        %683 = vmatmul.mubr.bf16.gmra.mrb[0].mxu0 %v582
        %v684 = vpop.f32.mrb[0].mxu0
        %v685 = vadd.f32 0.0, %v684
        %v686 = vpop.f32.mrb[0].mxu0
        %v687 = vpop.f32.mrb[0].mxu0
        %v688 = vadd.f32 0.0, %v687
        %v689 = vpop.f32.mrb[0].mxu0
        %690 = vmatprep.mubr.bf16.mxu0 %v585
        %691 = vmatmul.mubr.bf16.gmra.mrb[0].mxu0 %v584
        %v692 = vpop.f32.mrb[0].mxu0
        %v693 = vadd.f32 0.0, %v692
        %v694 = vpop.f32.mrb[0].mxu0
        %v695 = vpop.f32.mrb[0].mxu0
        %v696 = vadd.f32 0.0, %v695
        %v697 = vpop.f32.mrb[0].mxu0
        %698 = vdwg.mxu0
        %v699 = vld [vmem:[#allocation3] sm:$0xff]
        %v700 = vld [vmem:[#allocation3 + $0x8] sm:$0xff]
        %v701 = vld [vmem:[#allocation3 + $0x10] sm:$0xff]
        %v702 = vld [vmem:[#allocation3 + $0x18] sm:$0xff]
        %v703 = vld [vmem:[#allocation3 + $0x20] sm:$0xff]
        %v704 = vld [vmem:[#allocation3 + $0x28] sm:$0xff]
        %v705 = vld [vmem:[#allocation3 + $0x30] sm:$0xff]
        %v706 = vld [vmem:[#allocation3 + $0x38] sm:$0xff]
        %v707 = vld [vmem:[#allocation3 + $0x40] sm:$0xff]
        %v708 = vld [vmem:[#allocation3 + $0x48] sm:$0xff]
        %v709 = vld [vmem:[#allocation3 + $0x50] sm:$0xff]
        %v710 = vld [vmem:[#allocation3 + $0x58] sm:$0xff]
        %v711 = vld [vmem:[#allocation3 + $0x60] sm:$0xff]
        %v712 = vld [vmem:[#allocation3 + $0x68] sm:$0xff]
        %v713 = vld [vmem:[#allocation3 + $0x70] sm:$0xff]
        %v714 = vld [vmem:[#allocation3 + $0x78] sm:$0xff]
        %v731 = vunpack.c.l.b16 %v699
        %v732 = vunpack.c.h.b16 %v699
        %v733 = vunpack.c.l.b16 %v700
        %v734 = vunpack.c.h.b16 %v700
        %v735 = vunpack.c.l.b16 %v701
        %v736 = vunpack.c.h.b16 %v701
        %v737 = vunpack.c.l.b16 %v702
        %v738 = vunpack.c.h.b16 %v702
        %v739 = vunpack.c.l.b16 %v703
        %v740 = vunpack.c.h.b16 %v703
        %v741 = vunpack.c.l.b16 %v704
        %v742 = vunpack.c.h.b16 %v704
        %v743 = vunpack.c.l.b16 %v705
        %v744 = vunpack.c.h.b16 %v705
        %v745 = vunpack.c.l.b16 %v706
        %v746 = vunpack.c.h.b16 %v706
        %v747 = vunpack.c.l.b16 %v707
        %v748 = vunpack.c.h.b16 %v707
        %v749 = vunpack.c.l.b16 %v708
        %v750 = vunpack.c.h.b16 %v708
        %v751 = vunpack.c.l.b16 %v709
        %v752 = vunpack.c.h.b16 %v709
        %v753 = vunpack.c.l.b16 %v710
        %v754 = vunpack.c.h.b16 %v710
        %v755 = vunpack.c.l.b16 %v711
        %v756 = vunpack.c.h.b16 %v711
        %v757 = vunpack.c.l.b16 %v712
        %v758 = vunpack.c.h.b16 %v712
        %v759 = vunpack.c.l.b16 %v713
        %v760 = vunpack.c.h.b16 %v713
        %v761 = vunpack.c.l.b16 %v714
        %v762 = vunpack.c.h.b16 %v714
        %v763 = vpack.c.b16 %v733, %v731
        %v764 = vpack.c.b16 %v734, %v732
        %v765 = vpack.c.b16 %v737, %v735
        %v766 = vpack.c.b16 %v738, %v736
        %v767 = vpack.c.b16 %v741, %v739
        %v768 = vpack.c.b16 %v742, %v740
        %v769 = vpack.c.b16 %v745, %v743
        %v770 = vpack.c.b16 %v746, %v744
        %v771 = vpack.c.b16 %v749, %v747
        %v772 = vpack.c.b16 %v750, %v748
        %v773 = vpack.c.b16 %v753, %v751
        %v774 = vpack.c.b16 %v754, %v752
        %v775 = vpack.c.b16 %v757, %v755
        %v776 = vpack.c.b16 %v758, %v756
        %v777 = vpack.c.b16 %v761, %v759
        %v778 = vpack.c.b16 %v762, %v760
        %795 = vmatprep.subr.bf16.mxu0 %v503
        %796 = vmatpush1.bf16.xpose.msra.mxu0 %v502
        %797 = vmatprep.subr.bf16.mxu0 0
        %798 = vmatpush1.bf16.xpose.msra.mxu0 0
        %799 = vmatprep.subr.bf16.mxu0 0
        %800 = vmatpush1.bf16.xpose.msra.mxu0 0
        %801 = vmatprep.subr.bf16.mxu0 0
        %802 = vmatpush1.bf16.xpose.msra.mxu0 0
        %803 = vmatprep.subr.bf16.mxu0 0
        %804 = vmatpush1.bf16.xpose.msra.mxu0 0
        %805 = vmatprep.subr.bf16.mxu0 0
        %806 = vmatpush1.bf16.xpose.msra.mxu0 0
        %807 = vmatprep.subr.bf16.mxu0 0
        %808 = vmatpush1.bf16.xpose.msra.mxu0 0
        %809 = vmatprep.subr.bf16.mxu0 0
        %810 = vmatpush1.bf16.xpose.msra.mxu0 0
        %811 = vmatprep.subr.bf16.mxu0 0
        %812 = vmatpush1.bf16.xpose.msra.mxu0 0
        %813 = vmatprep.subr.bf16.mxu0 0
        %814 = vmatpush1.bf16.xpose.msra.mxu0 0
        %815 = vmatprep.subr.bf16.mxu0 0
        %816 = vmatpush1.bf16.xpose.msra.mxu0 0
        %817 = vmatprep.subr.bf16.mxu0 0
        %818 = vmatpush1.bf16.xpose.msra.mxu0 0
        %819 = vmatprep.subr.bf16.mxu0 0
        %820 = vmatpush1.bf16.xpose.msra.mxu0 0
        %821 = vmatprep.subr.bf16.mxu0 0
        %822 = vmatpush1.bf16.xpose.msra.mxu0 0
        %823 = vmatprep.subr.bf16.mxu0 0
        %824 = vmatpush1.bf16.xpose.msra.mxu0 0
        %825 = vmatprep.subr.bf16.mxu0 0
        %826 = vmatpush1.bf16.xpose.msra.mxu0 0
        %827 = vmatprep.mubr.bf16.mxu0 %v764
        %828 = vmatmul.mubr.bf16.gmra.mrb[0].mxu0 %v763
        %v829 = vpop.f32.mrb[0].mxu0
        %v830 = vadd.f32 0.0, %v829
        %v831 = vpop.f32.mrb[0].mxu0
        %v832 = vpop.f32.mrb[0].mxu0
        %v833 = vadd.f32 0.0, %v832
        %v834 = vpop.f32.mrb[0].mxu0
        %835 = vmatprep.mubr.bf16.mxu0 %v766
        %836 = vmatmul.mubr.bf16.gmra.mrb[0].mxu0 %v765
        %v837 = vpop.f32.mrb[0].mxu0
        %v838 = vadd.f32 0.0, %v837
        %v839 = vpop.f32.mrb[0].mxu0
        %v840 = vpop.f32.mrb[0].mxu0
        %v841 = vadd.f32 0.0, %v840
        %v842 = vpop.f32.mrb[0].mxu0
        %843 = vmatprep.mubr.bf16.mxu0 %v768
        %844 = vmatmul.mubr.bf16.gmra.mrb[0].mxu0 %v767
        %v845 = vpop.f32.mrb[0].mxu0
        %v846 = vadd.f32 0.0, %v845
        %v847 = vpop.f32.mrb[0].mxu0
        %v848 = vpop.f32.mrb[0].mxu0
        %v849 = vadd.f32 0.0, %v848
        %v850 = vpop.f32.mrb[0].mxu0
        %851 = vmatprep.mubr.bf16.mxu0 %v770
        %852 = vmatmul.mubr.bf16.gmra.mrb[0].mxu0 %v769
        %v853 = vpop.f32.mrb[0].mxu0
        %v854 = vadd.f32 0.0, %v853
        %v855 = vpop.f32.mrb[0].mxu0
        %v856 = vpop.f32.mrb[0].mxu0
        %v857 = vadd.f32 0.0, %v856
        %v858 = vpop.f32.mrb[0].mxu0
        %859 = vmatprep.mubr.bf16.mxu0 %v772
        %860 = vmatmul.mubr.bf16.gmra.mrb[0].mxu0 %v771
        %v861 = vpop.f32.mrb[0].mxu0
        %v862 = vadd.f32 0.0, %v861
        %v863 = vpop.f32.mrb[0].mxu0
        %v864 = vpop.f32.mrb[0].mxu0
        %v865 = vadd.f32 0.0, %v864
        %v866 = vpop.f32.mrb[0].mxu0
        %867 = vmatprep.mubr.bf16.mxu0 %v774
        %868 = vmatmul.mubr.bf16.gmra.mrb[0].mxu0 %v773
        %v869 = vpop.f32.mrb[0].mxu0
        %v870 = vadd.f32 0.0, %v869
        %v871 = vpop.f32.mrb[0].mxu0
        %v872 = vpop.f32.mrb[0].mxu0
        %v873 = vadd.f32 0.0, %v872
        %v874 = vpop.f32.mrb[0].mxu0
        %875 = vmatprep.mubr.bf16.mxu0 %v776
        %876 = vmatmul.mubr.bf16.gmra.mrb[0].mxu0 %v775
        %v877 = vpop.f32.mrb[0].mxu0
        %v878 = vadd.f32 0.0, %v877
        %v879 = vpop.f32.mrb[0].mxu0
        %v880 = vpop.f32.mrb[0].mxu0
        %v881 = vadd.f32 0.0, %v880
        %v882 = vpop.f32.mrb[0].mxu0
        %883 = vmatprep.mubr.bf16.mxu0 %v778
        %884 = vmatmul.mubr.bf16.gmra.mrb[0].mxu0 %v777
        %v885 = vpop.f32.mrb[0].mxu0
        %v886 = vadd.f32 0.0, %v885
        %v887 = vpop.f32.mrb[0].mxu0
        %v888 = vpop.f32.mrb[0].mxu0
        %v889 = vadd.f32 0.0, %v888
        %v890 = vpop.f32.mrb[0].mxu0
        %891 = vdwg.mxu0
        %v892 = vpack.c.bf16 %v640, %v637
        %v893 = vpack.c.bf16 %v648, %v645
        %v894 = vpack.c.bf16 %v656, %v653
        %v895 = vpack.c.bf16 %v664, %v661
        %v896 = vpack.c.bf16 %v672, %v669
        %v897 = vpack.c.bf16 %v680, %v677
        %v898 = vpack.c.bf16 %v688, %v685
        %v899 = vpack.c.bf16 %v696, %v693
        %v900 = vpack.c.bf16 %v833, %v830
        %v901 = vpack.c.bf16 %v841, %v838
        %v902 = vpack.c.bf16 %v849, %v846
        %v903 = vpack.c.bf16 %v857, %v854
        %v904 = vpack.c.bf16 %v865, %v862
        %v905 = vpack.c.bf16 %v873, %v870
        %v906 = vpack.c.bf16 %v881, %v878
        %v907 = vpack.c.bf16 %v889, %v886
        %vm908 = vcmask 64512
        %v910 = vsel %vm908, %v900, 0
        %v913 = vsel %vm908, %v901, 0
        %v916 = vsel %vm908, %v902, 0
        %v919 = vsel %vm908, %v903, 0
        %v922 = vsel %vm908, %v904, 0
        %v925 = vsel %vm908, %v905, 0
        %v928 = vsel %vm908, %v906, 0
        %v931 = vsel %vm908, %v907, 0
        %vm933 = vcmask 1043456
        %v935 = vsel %vm933, %v504, 0
        %v938 = vsel %vm933, %v505, 0
        %940 = vmatprep.subr.bf16.mxu0 %v938
        %941 = vmatpush1.bf16.msra.mxu0 %v935
        %942 = vmatprep.subr.bf16.mxu0 0
        %943 = vmatpush1.bf16.msra.mxu0 0
        %944 = vmatprep.subr.bf16.mxu0 0
        %945 = vmatpush1.bf16.msra.mxu0 0
        %946 = vmatprep.subr.bf16.mxu0 0
        %947 = vmatpush1.bf16.msra.mxu0 0
        %948 = vmatprep.subr.bf16.mxu0 0
        %949 = vmatpush1.bf16.msra.mxu0 0
        %950 = vmatprep.subr.bf16.mxu0 0
        %951 = vmatpush1.bf16.msra.mxu0 0
        %952 = vmatprep.subr.bf16.mxu0 0
        %953 = vmatpush1.bf16.msra.mxu0 0
        %954 = vmatprep.subr.bf16.mxu0 0
        %955 = vmatpush1.bf16.msra.mxu0 0
        %956 = vmatprep.subr.bf16.mxu0 0
        %957 = vmatpush1.bf16.msra.mxu0 0
        %958 = vmatprep.subr.bf16.mxu0 0
        %959 = vmatpush1.bf16.msra.mxu0 0
        %960 = vmatprep.subr.bf16.mxu0 0
        %961 = vmatpush1.bf16.msra.mxu0 0
        %962 = vmatprep.subr.bf16.mxu0 0
        %963 = vmatpush1.bf16.msra.mxu0 0
        %964 = vmatprep.subr.bf16.mxu0 0
        %965 = vmatpush1.bf16.msra.mxu0 0
        %966 = vmatprep.subr.bf16.mxu0 0
        %967 = vmatpush1.bf16.msra.mxu0 0
        %968 = vmatprep.subr.bf16.mxu0 0
        %969 = vmatpush1.bf16.msra.mxu0 0
        %970 = vmatprep.subr.bf16.mxu0 0
        %971 = vmatpush1.bf16.msra.mxu0 0
        %972 = vmatprep.mubr.bf16.mxu0 0
        %973 = vmatmul.mubr.bf16.gmra.mrb[0].mxu0 %v910
        %v974 = vpop.f32.mrb[0].mxu0
        %v975 = vadd.f32 0.0, %v974
        %v976 = vpop.f32.mrb[0].mxu0
        %v977 = vadd.f32 0.0, %v976
        %v978 = vpop.f32.mrb[0].mxu0
        %v979 = vadd.f32 0.0, %v978
        %v980 = vpop.f32.mrb[0].mxu0
        %v981 = vadd.f32 0.0, %v980
        %982 = vmatprep.mubr.bf16.mxu0 0
        %983 = vmatmul.mubr.bf16.gmra.mrb[0].mxu0 %v913
        %v984 = vpop.f32.mrb[0].mxu0
        %v985 = vadd.f32 0.0, %v984
        %v986 = vpop.f32.mrb[0].mxu0
        %v987 = vadd.f32 0.0, %v986
        %v988 = vpop.f32.mrb[0].mxu0
        %v989 = vadd.f32 0.0, %v988
        %v990 = vpop.f32.mrb[0].mxu0
        %v991 = vadd.f32 0.0, %v990
        %992 = vmatprep.mubr.bf16.mxu0 0
        %993 = vmatmul.mubr.bf16.gmra.mrb[0].mxu0 %v916
        %v994 = vpop.f32.mrb[0].mxu0
        %v995 = vadd.f32 0.0, %v994
        %v996 = vpop.f32.mrb[0].mxu0
        %v997 = vadd.f32 0.0, %v996
        %v998 = vpop.f32.mrb[0].mxu0
        %v999 = vadd.f32 0.0, %v998
        %v1000 = vpop.f32.mrb[0].mxu0
        %v1001 = vadd.f32 0.0, %v1000
        %1002 = vmatprep.mubr.bf16.mxu0 0
        %1003 = vmatmul.mubr.bf16.gmra.mrb[0].mxu0 %v919
        %v1004 = vpop.f32.mrb[0].mxu0
        %v1005 = vadd.f32 0.0, %v1004
        %v1006 = vpop.f32.mrb[0].mxu0
        %v1007 = vadd.f32 0.0, %v1006
        %v1008 = vpop.f32.mrb[0].mxu0
        %v1009 = vadd.f32 0.0, %v1008
        %v1010 = vpop.f32.mrb[0].mxu0
        %v1011 = vadd.f32 0.0, %v1010
        %1012 = vmatprep.mubr.bf16.mxu0 0
        %1013 = vmatmul.mubr.bf16.gmra.mrb[0].mxu0 %v922
        %v1014 = vpop.f32.mrb[0].mxu0
        %v1015 = vadd.f32 0.0, %v1014
        %v1016 = vpop.f32.mrb[0].mxu0
        %v1017 = vadd.f32 0.0, %v1016
        %v1018 = vpop.f32.mrb[0].mxu0
        %v1019 = vadd.f32 0.0, %v1018
        %v1020 = vpop.f32.mrb[0].mxu0
        %v1021 = vadd.f32 0.0, %v1020
        %1022 = vmatprep.mubr.bf16.mxu0 0
        %1023 = vmatmul.mubr.bf16.gmra.mrb[0].mxu0 %v925
        %v1024 = vpop.f32.mrb[0].mxu0
        %v1025 = vadd.f32 0.0, %v1024
        %v1026 = vpop.f32.mrb[0].mxu0
        %v1027 = vadd.f32 0.0, %v1026
        %v1028 = vpop.f32.mrb[0].mxu0
        %v1029 = vadd.f32 0.0, %v1028
        %v1030 = vpop.f32.mrb[0].mxu0
        %v1031 = vadd.f32 0.0, %v1030
        %1032 = vmatprep.mubr.bf16.mxu0 0
        %1033 = vmatmul.mubr.bf16.gmra.mrb[0].mxu0 %v928
        %v1034 = vpop.f32.mrb[0].mxu0
        %v1035 = vadd.f32 0.0, %v1034
        %v1036 = vpop.f32.mrb[0].mxu0
        %v1037 = vadd.f32 0.0, %v1036
        %v1038 = vpop.f32.mrb[0].mxu0
        %v1039 = vadd.f32 0.0, %v1038
        %v1040 = vpop.f32.mrb[0].mxu0
        %v1041 = vadd.f32 0.0, %v1040
        %1042 = vmatprep.mubr.bf16.mxu0 0
        %1043 = vmatmul.mubr.bf16.gmra.mrb[0].mxu0 %v931
        %v1044 = vpop.f32.mrb[0].mxu0
        %v1045 = vadd.f32 0.0, %v1044
        %v1046 = vpop.f32.mrb[0].mxu0
        %v1047 = vadd.f32 0.0, %v1046
        %v1048 = vpop.f32.mrb[0].mxu0
        %v1049 = vadd.f32 0.0, %v1048
        %v1050 = vpop.f32.mrb[0].mxu0
        %v1051 = vadd.f32 0.0, %v1050
        %1052 = vdwg.mxu0
        %v1054 = vsel %vm908, %v892, 0
        %v1057 = vsel %vm908, %v893, 0
        %v1060 = vsel %vm908, %v894, 0
        %v1063 = vsel %vm908, %v895, 0
        %v1066 = vsel %vm908, %v896, 0
        %v1069 = vsel %vm908, %v897, 0
        %v1072 = vsel %vm908, %v898, 0
        %v1075 = vsel %vm908, %v899, 0
        %v1078 = vsel %vm933, %v502, 0
        %v1081 = vsel %vm933, %v503, 0
        %1083 = vmatprep.subr.bf16.mxu0 %v1081
        %1084 = vmatpush1.bf16.msra.mxu0 %v1078
        %1085 = vmatprep.subr.bf16.mxu0 0
        %1086 = vmatpush1.bf16.msra.mxu0 0
        %1087 = vmatprep.subr.bf16.mxu0 0
        %1088 = vmatpush1.bf16.msra.mxu0 0
        %1089 = vmatprep.subr.bf16.mxu0 0
        %1090 = vmatpush1.bf16.msra.mxu0 0
        %1091 = vmatprep.subr.bf16.mxu0 0
        %1092 = vmatpush1.bf16.msra.mxu0 0
        %1093 = vmatprep.subr.bf16.mxu0 0
        %1094 = vmatpush1.bf16.msra.mxu0 0
        %1095 = vmatprep.subr.bf16.mxu0 0
        %1096 = vmatpush1.bf16.msra.mxu0 0
        %1097 = vmatprep.subr.bf16.mxu0 0
        %1098 = vmatpush1.bf16.msra.mxu0 0
        %1099 = vmatprep.subr.bf16.mxu0 0
        %1100 = vmatpush1.bf16.msra.mxu0 0
        %1101 = vmatprep.subr.bf16.mxu0 0
        %1102 = vmatpush1.bf16.msra.mxu0 0
        %1103 = vmatprep.subr.bf16.mxu0 0
        %1104 = vmatpush1.bf16.msra.mxu0 0
        %1105 = vmatprep.subr.bf16.mxu0 0
        %1106 = vmatpush1.bf16.msra.mxu0 0
        %1107 = vmatprep.subr.bf16.mxu0 0
        %1108 = vmatpush1.bf16.msra.mxu0 0
        %1109 = vmatprep.subr.bf16.mxu0 0
        %1110 = vmatpush1.bf16.msra.mxu0 0
        %1111 = vmatprep.subr.bf16.mxu0 0
        %1112 = vmatpush1.bf16.msra.mxu0 0
        %1113 = vmatprep.subr.bf16.mxu0 0
        %1114 = vmatpush1.bf16.msra.mxu0 0
        %1115 = vmatprep.mubr.bf16.mxu0 0
        %1116 = vmatmul.mubr.bf16.gmra.mrb[0].mxu0 %v1054
        %v1117 = vpop.f32.mrb[0].mxu0
        %v1118 = vadd.f32 %v975, %v1117
        %v1119 = vpop.f32.mrb[0].mxu0
        %v1120 = vadd.f32 %v977, %v1119
        %v1121 = vpop.f32.mrb[0].mxu0
        %v1122 = vadd.f32 %v979, %v1121
        %v1123 = vpop.f32.mrb[0].mxu0
        %v1124 = vadd.f32 %v981, %v1123
        %1125 = vmatprep.mubr.bf16.mxu0 0
        %1126 = vmatmul.mubr.bf16.gmra.mrb[0].mxu0 %v1057
        %v1127 = vpop.f32.mrb[0].mxu0
        %v1128 = vadd.f32 %v985, %v1127
        %v1129 = vpop.f32.mrb[0].mxu0
        %v1130 = vadd.f32 %v987, %v1129
        %v1131 = vpop.f32.mrb[0].mxu0
        %v1132 = vadd.f32 %v989, %v1131
        %v1133 = vpop.f32.mrb[0].mxu0
        %v1134 = vadd.f32 %v991, %v1133
        %1135 = vmatprep.mubr.bf16.mxu0 0
        %1136 = vmatmul.mubr.bf16.gmra.mrb[0].mxu0 %v1060
        %v1137 = vpop.f32.mrb[0].mxu0
        %v1138 = vadd.f32 %v995, %v1137
        %v1139 = vpop.f32.mrb[0].mxu0
        %v1140 = vadd.f32 %v997, %v1139
        %v1141 = vpop.f32.mrb[0].mxu0
        %v1142 = vadd.f32 %v999, %v1141
        %v1143 = vpop.f32.mrb[0].mxu0
        %v1144 = vadd.f32 %v1001, %v1143
        %1145 = vmatprep.mubr.bf16.mxu0 0
        %1146 = vmatmul.mubr.bf16.gmra.mrb[0].mxu0 %v1063
        %v1147 = vpop.f32.mrb[0].mxu0
        %v1148 = vadd.f32 %v1005, %v1147
        %v1149 = vpop.f32.mrb[0].mxu0
        %v1150 = vadd.f32 %v1007, %v1149
        %v1151 = vpop.f32.mrb[0].mxu0
        %v1152 = vadd.f32 %v1009, %v1151
        %v1153 = vpop.f32.mrb[0].mxu0
        %v1154 = vadd.f32 %v1011, %v1153
        %1155 = vmatprep.mubr.bf16.mxu0 0
        %1156 = vmatmul.mubr.bf16.gmra.mrb[0].mxu0 %v1066
        %v1157 = vpop.f32.mrb[0].mxu0
        %v1158 = vadd.f32 %v1015, %v1157
        %v1159 = vpop.f32.mrb[0].mxu0
        %v1160 = vadd.f32 %v1017, %v1159
        %v1161 = vpop.f32.mrb[0].mxu0
        %v1162 = vadd.f32 %v1019, %v1161
        %v1163 = vpop.f32.mrb[0].mxu0
        %v1164 = vadd.f32 %v1021, %v1163
        %1165 = vmatprep.mubr.bf16.mxu0 0
        %1166 = vmatmul.mubr.bf16.gmra.mrb[0].mxu0 %v1069
        %v1167 = vpop.f32.mrb[0].mxu0
        %v1168 = vadd.f32 %v1025, %v1167
        %v1169 = vpop.f32.mrb[0].mxu0
        %v1170 = vadd.f32 %v1027, %v1169
        %v1171 = vpop.f32.mrb[0].mxu0
        %v1172 = vadd.f32 %v1029, %v1171
        %v1173 = vpop.f32.mrb[0].mxu0
        %v1174 = vadd.f32 %v1031, %v1173
        %1175 = vmatprep.mubr.bf16.mxu0 0
        %1176 = vmatmul.mubr.bf16.gmra.mrb[0].mxu0 %v1072
        %v1177 = vpop.f32.mrb[0].mxu0
        %v1178 = vadd.f32 %v1035, %v1177
        %v1179 = vpop.f32.mrb[0].mxu0
        %v1180 = vadd.f32 %v1037, %v1179
        %v1181 = vpop.f32.mrb[0].mxu0
        %v1182 = vadd.f32 %v1039, %v1181
        %v1183 = vpop.f32.mrb[0].mxu0
        %v1184 = vadd.f32 %v1041, %v1183
        %1185 = vmatprep.mubr.bf16.mxu0 0
        %1186 = vmatmul.mubr.bf16.gmra.mrb[0].mxu0 %v1075
        %v1187 = vpop.f32.mrb[0].mxu0
        %v1188 = vadd.f32 %v1045, %v1187
        %v1189 = vpop.f32.mrb[0].mxu0
        %v1190 = vadd.f32 %v1047, %v1189
        %v1191 = vpop.f32.mrb[0].mxu0
        %v1192 = vadd.f32 %v1049, %v1191
        %v1193 = vpop.f32.mrb[0].mxu0
        %v1194 = vadd.f32 %v1051, %v1193
        %1195 = vdwg.mxu0
        %v1196 = vld [vmem:[%s5] sm:$0xff]
        %v1197 = vld [vmem:[%s5 + $0x8] sm:$0xff]
        %v1198 = vld [vmem:[%s5 + $0x10] sm:$0xff]
        %v1199 = vld [vmem:[%s5 + $0x18] sm:$0xff]
        %v1200 = vld [vmem:[%s5 + $0x20] sm:$0xff]
        %v1201 = vld [vmem:[%s5 + $0x28] sm:$0xff]
        %v1202 = vld [vmem:[%s5 + $0x30] sm:$0xff]
        %v1203 = vld [vmem:[%s5 + $0x38] sm:$0xff]
        %v1204 = vld [vmem:[%s5 + $0x40] sm:$0xff]
        %v1205 = vld [vmem:[%s5 + $0x48] sm:$0xff]
        %v1206 = vld [vmem:[%s5 + $0x50] sm:$0xff]
        %v1207 = vld [vmem:[%s5 + $0x58] sm:$0xff]
        %v1208 = vld [vmem:[%s5 + $0x60] sm:$0xff]
        %v1209 = vld [vmem:[%s5 + $0x68] sm:$0xff]
        %v1210 = vld [vmem:[%s5 + $0x70] sm:$0xff]
        %v1211 = vld [vmem:[%s5 + $0x78] sm:$0xff]
        %1213 = vset.pattern.permute.xlu0 0
        %1214 = vperm.xlu0 %1213, %v1196
        %v1215 = vpop.permute.xlu0 %1214
        %1218 = vset.pattern.permute.xlu0 0
        %1219 = vperm.xlu0 %1218, %v1197
        %v1220 = vpop.permute.xlu0 %1219
        %1223 = vset.pattern.permute.xlu0 0
        %1224 = vperm.xlu0 %1223, %v1198
        %v1225 = vpop.permute.xlu0 %1224
        %1228 = vset.pattern.permute.xlu0 0
        %1229 = vperm.xlu0 %1228, %v1199
        %v1230 = vpop.permute.xlu0 %1229
        %1233 = vset.pattern.permute.xlu0 0
        %1234 = vperm.xlu0 %1233, %v1200
        %v1235 = vpop.permute.xlu0 %1234
        %1238 = vset.pattern.permute.xlu0 0
        %1239 = vperm.xlu0 %1238, %v1201
        %v1240 = vpop.permute.xlu0 %1239
        %1243 = vset.pattern.permute.xlu0 0
        %1244 = vperm.xlu0 %1243, %v1202
        %v1245 = vpop.permute.xlu0 %1244
        %1248 = vset.pattern.permute.xlu0 0
        %1249 = vperm.xlu0 %1248, %v1203
        %v1250 = vpop.permute.xlu0 %1249
        %1253 = vset.pattern.permute.xlu0 0
        %1254 = vperm.xlu0 %1253, %v1204
        %v1255 = vpop.permute.xlu0 %1254
        %1258 = vset.pattern.permute.xlu0 0
        %1259 = vperm.xlu0 %1258, %v1205
        %v1260 = vpop.permute.xlu0 %1259
        %1263 = vset.pattern.permute.xlu0 0
        %1264 = vperm.xlu0 %1263, %v1206
        %v1265 = vpop.permute.xlu0 %1264
        %1268 = vset.pattern.permute.xlu0 0
        %1269 = vperm.xlu0 %1268, %v1207
        %v1270 = vpop.permute.xlu0 %1269
        %1273 = vset.pattern.permute.xlu0 0
        %1274 = vperm.xlu0 %1273, %v1208
        %v1275 = vpop.permute.xlu0 %1274
        %1278 = vset.pattern.permute.xlu0 0
        %1279 = vperm.xlu0 %1278, %v1209
        %v1280 = vpop.permute.xlu0 %1279
        %1283 = vset.pattern.permute.xlu0 0
        %1284 = vperm.xlu0 %1283, %v1210
        %v1285 = vpop.permute.xlu0 %1284
        %1288 = vset.pattern.permute.xlu0 0
        %1289 = vperm.xlu0 %1288, %v1211
        %v1290 = vpop.permute.xlu0 %1289
        %v1292 = vadd.f32 %v1118, %v1215
        %v1293 = vadd.f32 %v1120, %v1215
        %v1294 = vadd.f32 %v1122, %v1220
        %v1295 = vadd.f32 %v1124, %v1220
        %v1296 = vadd.f32 %v1128, %v1225
        %v1297 = vadd.f32 %v1130, %v1225
        %v1298 = vadd.f32 %v1132, %v1230
        %v1299 = vadd.f32 %v1134, %v1230
        %v1300 = vadd.f32 %v1138, %v1235
        %v1301 = vadd.f32 %v1140, %v1235
        %v1302 = vadd.f32 %v1142, %v1240
        %v1303 = vadd.f32 %v1144, %v1240
        %v1304 = vadd.f32 %v1148, %v1245
        %v1305 = vadd.f32 %v1150, %v1245
        %v1306 = vadd.f32 %v1152, %v1250
        %v1307 = vadd.f32 %v1154, %v1250
        %v1308 = vadd.f32 %v1158, %v1255
        %v1309 = vadd.f32 %v1160, %v1255
        %v1310 = vadd.f32 %v1162, %v1260
        %v1311 = vadd.f32 %v1164, %v1260
        %v1312 = vadd.f32 %v1168, %v1265
        %v1313 = vadd.f32 %v1170, %v1265
        %v1314 = vadd.f32 %v1172, %v1270
        %v1315 = vadd.f32 %v1174, %v1270
        %v1316 = vadd.f32 %v1178, %v1275
        %v1317 = vadd.f32 %v1180, %v1275
        %v1318 = vadd.f32 %v1182, %v1280
        %v1319 = vadd.f32 %v1184, %v1280
        %v1320 = vadd.f32 %v1188, %v1285
        %v1321 = vadd.f32 %v1190, %v1285
        %v1322 = vadd.f32 %v1192, %v1290
        %v1323 = vadd.f32 %v1194, %v1290
        %v1324 = vmax.f32 %v1292, 0.0
        %v1325 = vmax.f32 %v1293, 0.0
        %v1326 = vmax.f32 %v1294, 0.0
        %v1327 = vmax.f32 %v1295, 0.0
        %v1328 = vmax.f32 %v1296, 0.0
        %v1329 = vmax.f32 %v1297, 0.0
        %v1330 = vmax.f32 %v1298, 0.0
        %v1331 = vmax.f32 %v1299, 0.0
        %v1332 = vmax.f32 %v1300, 0.0
        %v1333 = vmax.f32 %v1301, 0.0
        %v1334 = vmax.f32 %v1302, 0.0
        %v1335 = vmax.f32 %v1303, 0.0
        %v1336 = vmax.f32 %v1304, 0.0
        %v1337 = vmax.f32 %v1305, 0.0
        %v1338 = vmax.f32 %v1306, 0.0
        %v1339 = vmax.f32 %v1307, 0.0
        %v1340 = vmax.f32 %v1308, 0.0
        %v1341 = vmax.f32 %v1309, 0.0
        %v1342 = vmax.f32 %v1310, 0.0
        %v1343 = vmax.f32 %v1311, 0.0
        %v1344 = vmax.f32 %v1312, 0.0
        %v1345 = vmax.f32 %v1313, 0.0
        %v1346 = vmax.f32 %v1314, 0.0
        %v1347 = vmax.f32 %v1315, 0.0
        %v1348 = vmax.f32 %v1316, 0.0
        %v1349 = vmax.f32 %v1317, 0.0
        %v1350 = vmax.f32 %v1318, 0.0
        %v1351 = vmax.f32 %v1319, 0.0
        %v1352 = vmax.f32 %v1320, 0.0
        %v1353 = vmax.f32 %v1321, 0.0
        %v1354 = vmax.f32 %v1322, 0.0
        %v1355 = vmax.f32 %v1323, 0.0
        %v1356 = vrot.slane %v500, 4
        %v1357 = vadd.f32 %v500, %v1356
        %v1358 = vrot.slane %v1357, 2
        %v1359 = vadd.f32 %v1357, %v1358
        %v1360 = vrot.slane %v1359, 1
        %v1361 = vadd.f32 %v1359, %v1360
        %v1362 = vrot.slane %v501, 4
        %v1363 = vadd.f32 %v501, %v1362
        %v1364 = vrot.slane %v1363, 2
        %v1365 = vadd.f32 %v1363, %v1364
        %v1366 = vrot.slane %v1365, 1
        %v1367 = vadd.f32 %v1365, %v1366
        %v1368 = vrcp.pop 8.0
        %v1369 = vmul.f32 %v1361, %v1368
        %v1370 = vmul.f32 %v1367, %v1368
        %v1371 = vld [vmem:[%s6] sm:$0xff]
        %v1372 = vld [vmem:[%s6 + $0x8] sm:$0xff]
        %1374 = vset.pattern.permute.xlu0 0
        %1375 = vperm.xlu0 %1374, %v1371
        %v1376 = vpop.permute.xlu0 %1375
        %1379 = vset.pattern.permute.xlu0 0
        %1380 = vperm.xlu0 %1379, %v1372
        %v1381 = vpop.permute.xlu0 %1380
        %v1383 = vmul.f32 %v1376, %v1369
        %v1384 = vmul.f32 %v1376, %v1370
        %v1385 = vmul.f32 %v1381, %v1369
        %v1386 = vmul.f32 %v1381, %v1370
        %v1387 = vld [vmem:[%s7] sm:$0xf]
        %v1388 = vld [vmem:[%s7 + $0x4] sm:$0xf]
        %v1389 = vpack.c.bf16 %v1326, %v1324
        %v1390 = vpack.c.bf16 %v1327, %v1325
        %v1391 = vpack.c.bf16 %v1330, %v1328
        %v1392 = vpack.c.bf16 %v1331, %v1329
        %v1393 = vpack.c.bf16 %v1334, %v1332
        %v1394 = vpack.c.bf16 %v1335, %v1333
        %v1395 = vpack.c.bf16 %v1338, %v1336
        %v1396 = vpack.c.bf16 %v1339, %v1337
        %v1397 = vpack.c.bf16 %v1342, %v1340
        %v1398 = vpack.c.bf16 %v1343, %v1341
        %v1399 = vpack.c.bf16 %v1346, %v1344
        %v1400 = vpack.c.bf16 %v1347, %v1345
        %v1401 = vpack.c.bf16 %v1350, %v1348
        %v1402 = vpack.c.bf16 %v1351, %v1349
        %v1403 = vpack.c.bf16 %v1354, %v1352
        %v1404 = vpack.c.bf16 %v1355, %v1353
        %v1407 = vunpack.c.l.b16 %v1387
        %v1408 = vunpack.c.l.b16 %v1388
        %v1409 = vpack.c.b16 %v1408, %v1407
        %1411 = vmatprep.subr.bf16.mxu0 %v1390
        %1412 = vmatpush1.bf16.msra.mxu0 %v1389
        %1413 = vmatprep.subr.bf16.mxu0 %v1392
        %1414 = vmatpush1.bf16.msra.mxu0 %v1391
        %1415 = vmatprep.subr.bf16.mxu0 %v1394
        %1416 = vmatpush1.bf16.msra.mxu0 %v1393
        %1417 = vmatprep.subr.bf16.mxu0 %v1396
        %1418 = vmatpush1.bf16.msra.mxu0 %v1395
        %1419 = vmatprep.subr.bf16.mxu0 %v1398
        %1420 = vmatpush1.bf16.msra.mxu0 %v1397
        %1421 = vmatprep.subr.bf16.mxu0 %v1400
        %1422 = vmatpush1.bf16.msra.mxu0 %v1399
        %1423 = vmatprep.subr.bf16.mxu0 %v1402
        %1424 = vmatpush1.bf16.msra.mxu0 %v1401
        %1425 = vmatprep.subr.bf16.mxu0 %v1404
        %1426 = vmatpush1.bf16.msra.mxu0 %v1403
        %1427 = vmatprep.subr.bf16.mxu0 0
        %1428 = vmatpush1.bf16.msra.mxu0 0
        %1429 = vmatprep.subr.bf16.mxu0 0
        %1430 = vmatpush1.bf16.msra.mxu0 0
        %1431 = vmatprep.subr.bf16.mxu0 0
        %1432 = vmatpush1.bf16.msra.mxu0 0
        %1433 = vmatprep.subr.bf16.mxu0 0
        %1434 = vmatpush1.bf16.msra.mxu0 0
        %1435 = vmatprep.subr.bf16.mxu0 0
        %1436 = vmatpush1.bf16.msra.mxu0 0
        %1437 = vmatprep.subr.bf16.mxu0 0
        %1438 = vmatpush1.bf16.msra.mxu0 0
        %1439 = vmatprep.subr.bf16.mxu0 0
        %1440 = vmatpush1.bf16.msra.mxu0 0
        %1441 = vmatprep.subr.bf16.mxu0 0
        %1442 = vmatpush1.bf16.msra.mxu0 0
        %1443 = vmatprep.mubr.bf16.mxu0 0
        %1444 = vmatmul.mubr.bf16.gmra.mrb[0].mxu0 %v1409
        %v1445 = vpop.f32.mrb[0].mxu0
        %v1446 = vadd.f32 0.0, %v1445
        %v1447 = vpop.f32.mrb[0].mxu0
        %v1448 = vadd.f32 0.0, %v1447
        %v1449 = vpop.f32.mrb[0].mxu0
        %v1450 = vadd.f32 0.0, %v1449
        %v1451 = vpop.f32.mrb[0].mxu0
        %v1452 = vadd.f32 0.0, %v1451
        %1453 = vdwg.mxu0
        %v1454 = vadd.f32 %v1383, %v1446
        %v1455 = vadd.f32 %v1384, %v1448
        %v1456 = vadd.f32 %v1385, %v1450
        %v1457 = vadd.f32 %v1386, %v1452
        %v1458 = vld [vmem:[%s8] sm:$0xff]
        %v1459 = vld [vmem:[%s8 + $0x8] sm:$0xff]
        %1461 = vset.pattern.permute.xlu0 0
        %1462 = vperm.xlu0 %1461, %v1458
        %v1463 = vpop.permute.xlu0 %1462
        %1466 = vset.pattern.permute.xlu0 0
        %1467 = vperm.xlu0 %1466, %v1459
        %v1468 = vpop.permute.xlu0 %1467
        %v1470 = vadd.f32 %v1454, %v1463
        %v1471 = vadd.f32 %v1455, %v1463
        %v1472 = vadd.f32 %v1456, %v1468
        %v1473 = vadd.f32 %v1457, %v1468
        %v1474 = vmax.f32 %v1470, 0.0
        %v1475 = vmax.f32 %v1471, 0.0
        %v1476 = vmax.f32 %v1472, 0.0
        %v1477 = vmax.f32 %v1473, 0.0
        %v1478 = vld [vmem:[%s9] sm:$0xff]
        %v1479 = vld [vmem:[%s9 + $0x8] sm:$0xff]
        %1481 = vset.pattern.permute.xlu0 0
        %1482 = vperm.xlu0 %1481, %v1478
        %v1483 = vpop.permute.xlu0 %1482
        %1486 = vset.pattern.permute.xlu0 0
        %1487 = vperm.xlu0 %1486, %v1479
        %v1488 = vpop.permute.xlu0 %1487
        %v1490 = vmul.f32 %v1474, %v1483
        %v1491 = vmul.f32 %v1475, %v1483
        %v1492 = vmul.f32 %v1476, %v1488
        %v1493 = vmul.f32 %v1477, %v1488
        %v1494 = vadd.f32 %v1490, %v1492
        %v1495 = vrot.slane %v1494, 4
        %v1496 = vadd.f32 %v1494, %v1495
        %v1497 = vrot.slane %v1496, 2
        %v1498 = vadd.f32 %v1496, %v1497
        %v1499 = vrot.slane %v1498, 1
        %v1500 = vadd.f32 %v1498, %v1499
        %v1501 = vadd.f32 %v1491, %v1493
        %v1502 = vrot.slane %v1501, 4
        %v1503 = vadd.f32 %v1501, %v1502
        %v1504 = vrot.slane %v1503, 2
        %v1505 = vadd.f32 %v1503, %v1504
        %v1506 = vrot.slane %v1505, 1
        %v1507 = vadd.f32 %v1505, %v1506
        %v1508 = vld [vmem:[#allocation2] sm:$0x1]
        %1510 = vset.pattern.permute.xlu0 0
        %1511 = vperm.xlu0 %1510, %v1508
        %v1512 = vpop.permute.xlu0 %1511
        %v1514 = vlaneseq
        %v1515 = vshrl.u32 %v1514, 7
        %v1516 = vsub.s32 0, %v1515
        %v1517 = vrot.slane %v1512, %v1516
        %v1518 = vadd.f32 %v1500, %v1517
        %v1519 = vadd.f32 %v1507, %v1517
        %v1520 = vxor.u32 %v1518, 2147483648
        %v1521 = vxor.u32 %v1519, 2147483648
        %v1522 = vmul.f32 %v1520, 1.442695
        %v1523 = vpow.pop %v1522
        %v1524 = vmul.f32 %v1521, 1.442695
        %v1525 = vpow.pop %v1524
        %v1526 = vadd.f32 %v1523, 1.0
        %v1527 = vadd.f32 %v1525, 1.0
        %v1528 = vrcp.pop %v1526
        %v1529 = vmul.f32 1.0, %v1528
        %v1530 = vrcp.pop %v1527
        %v1531 = vmul.f32 1.0, %v1530
        %v1532 = vmul.f32 %v1529, %v403
        %v1533 = vmul.f32 %v1531, %v404
        %v1534 = vmul.f32 %v1529, %v405
        %v1535 = vmul.f32 %v1531, %v406
        %1536 = vst [vmem:[%s396] sm:$0xff] %v1532
        %1537 = vst [vmem:[%s396 + $0x8] sm:$0xff] %v1533
        %1538 = vst [vmem:[%s396 + $0x10] sm:$0xff] %v1534
        %1539 = vst [vmem:[%s396 + $0x18] sm:$0xff] %v1535
        %s1540 = sand.u32 %s272, 1
        %s1541 = scalar_lea.sflag [#allocation5], %s1540
        %s1542 = sand.u32 %s272, 1
        %s1543 = smul.addr %s1542, 32
        %s1544 = scalar_lea.vmem [#allocation6], %s1543
        // Predicated region
        $region69: #{tpu_custom_call.1} parent=63 // pred_check
          %p1545 = pneg %p282
        $region70: #{tpu_custom_call.1} parent=63 // pred_check_branch
          %1547 = sbr.rel (%p1545) target = $region72
        $region71: #{tpu_custom_call.1} parent=63 // pred_region
          %s1549 = ssub.s32 512, 512
          %1550 = vsyncadd %s1541, %s1549
          %s1551 = smul.addr %s28, 4
          %s1552 = smul.addr %s1551, 128
          %s1553 = scalar_lea.hbm %s11, %s1552
          %s1554 = sshll.u32 %s1544, 4
          %s1555 = int_to_ptr.vmem [resolvable:$true] %s1554
          %1560 = dma.vmem_to_hbm [thread:$0]  %s1555, 512, %s1553, %s1541, 256, 256, 16
        $region72: #{tpu_custom_call.1} parent=63 // pred_fallthru
          _
      $region64: #{tpu_custom_call.1} parent=5 // pred_fallthru
        _
      %p1561 = scmp.le.s32.totalorder 2, %s23
      // Predicated region
      $region73: #{tpu_custom_call.1} parent=5 // pred_check
        %p1562 = pneg %p1561
      $region74: #{tpu_custom_call.1} parent=5 // pred_check_branch
        %1564 = sbr.rel (%p1562) target = $region76
      $region75: #{tpu_custom_call.1} parent=5 // pred_region
        %s1565 = ssub.s32 %s23, 2
        // Predicated region
        $region77: #{tpu_custom_call.1} parent=75 // pred_check
          %p1566 = pneg %p288
        $region78: #{tpu_custom_call.1} parent=75 // pred_check_branch
          %1568 = sbr.rel (%p1566) target = $region80
        $region79: #{tpu_custom_call.1} parent=75 // pred_region
          %s1569 = sand.u32 %s273, 1
          %s1570 = scalar_lea.sflag [#allocation5], %s1569
          %s1571 = sand.u32 %s273, 1
          %s1572 = smul.addr %s1571, 32
          %s1573 = scalar_lea.vmem [#allocation6], %s1572
          %1574 = dma.done %s1570, 512
        $region80: #{tpu_custom_call.1} parent=75 // pred_fallthru
          _
      $region76: #{tpu_custom_call.1} parent=5 // pred_fallthru
        _
    $region6: #{tpu_custom_call.1} parent=1 // loop_footer
      %s27 = sadd.s32 1, %s23
    $region7: #{tpu_custom_call.1} parent=1 // loop_footer_branch
      %22 = sbr.rel target = $region3
    $region8: #{tpu_custom_call.1} parent=1 // loop_exit
      _
    %1575 = vsyncpa [#allocation4], 1
    %s1576 = scalar_lea.sflag [#allocation4], 1
    %1577 = vsyncpa %s1576, 1
    %1578 = vsyncpa [#allocation5], 1
    %s1579 = scalar_lea.sflag [#allocation5], 1
    %1580 = vsyncpa %s1579, 1

</llo_original>
